<compile_context>
chip_gen: v6e
topology: v6e:2x2x1
jax: 0.10.0
libtpu: 0.0.40
codegen_flags: <defaults>
</compile_context>

<pallas_src>
import jax
import jax.numpy as jnp
from jax import lax
from jax.experimental import pallas as pl
from jax.experimental.pallas import tpu as pltpu

SUBLANE = 8          # f32 sublane multiple
LANE = 128           # TPU lane width
HP = LANE            # padded LSTM hidden width  (H=32  -> 128): one lane tile/gate
HIDP = LANE          # padded classifier hidden width (64 -> 128)
CP = LANE            # padded logits width (num_classes -> 128)
PACK_ORDER = (0, 1, 3, 2)   # PyTorch gate order (i, f, g, o) -> packed (i, f, o, g)


def _lstm_classifier_kernel(x_ref, lens_ref, w_ref, b_ref, out_ref,
                            gx_ref, h_ref, c_ref):
    # x_ref:    (Bp, Tblk, Fp) bf16   one time block, batch-first (no HBM transpose)
    # lens_ref: (Bp, 1)        int32
    # w_ref:    (Fp + 3*HP, 4*HP) bf16  packed [w_ih; w_hh; w1; w2] slab
    # b_ref:    (1, 4*HP + HIDP + CP) f32  packed [b_gates | b1 | b2]
    # out_ref:  (Bp, CP)       f32
    # gx_ref:   (Tblk, Bp, 4*HP) f32 scratch   (per-block hoisted input projection)
    # h_ref/c_ref: (Bp, HP) f32 scratch        (recurrent carry across grid steps)
    tb = pl.program_id(0)
    Bp, Tblk, Fp = x_ref.shape
    Hp = h_ref.shape[1]
    G = 4 * Hp

    @pl.when(tb == 0)
    def _init():
        h_ref[...] = jnp.zeros_like(h_ref)
        c_ref[...] = jnp.zeros_like(c_ref)

    # Packed-weight views: static, tile-aligned row slices of the bf16 slab.
    w_ih = w_ref[0:Fp, :]                       # (Fp, 4*Hp)
    w_hh = w_ref[Fp:Fp + Hp, :]                 # (Hp, 4*Hp)

    # Hoisted input projection for the whole time block: one bf16 MXU matmul.
    x_flat = x_ref[...].reshape(Bp * Tblk, Fp)  # merge leading dims (layout no-op)
    gx = jnp.dot(x_flat, w_ih, preferred_element_type=jnp.float32) + b_ref[:, 0:G]
    gx = gx.reshape(Bp, Tblk, G)
    # One-time-per-block layout fixup to time-major so every recurrence step reads
    # a clean first-axis, tile-aligned (Bp, 4*Hp) slab: gx_ref[t].
    for t in range(Tblk):                       # static; stores only
        gx_ref[t] = gx[:, t, :]

    lens_b = jnp.broadcast_to(lens_ref[...], (Bp, Hp))   # (Bp, Hp) int32, hoisted
    t0 = tb * Tblk

    def step(t, carry):
        h, c = carry
        # Only the unavoidable recurrent matmul stays inside the serial loop.
        gates = gx_ref[t] + jnp.dot(h.astype(jnp.bfloat16), w_hh,
                                    preferred_element_type=jnp.float32)  # (Bp, 4Hp)
        # Packed gate order i, f, o | g: 2 EUP dispatches per step instead of 4.
        sig = jax.nn.sigmoid(gates[:, 0:3 * Hp])
        i_g = sig[:, 0 * Hp:1 * Hp]
        f_g = sig[:, 1 * Hp:2 * Hp]
        o_g = sig[:, 2 * Hp:3 * Hp]
        g_g = jnp.tanh(gates[:, 3 * Hp:4 * Hp])
        c_new = f_g * c + i_g * g_g
        h_new = o_g * jnp.tanh(c_new)
        # pack_padded_sequence semantics: freeze h/c once past the real length.
        valid = (t0 + t) < lens_b
        return (jnp.where(valid, h_new, h), jnp.where(valid, c_new, c))

    # Tblk is small & static: full unroll lets the scheduler overlap step t+1's
    # MXU push with step t's EUP/VPU gate math.  (Use partial unroll for big Tblk.)
    h, c = lax.fori_loop(0, Tblk, step, (h_ref[...], c_ref[...]), unroll=True)
    h_ref[...] = h
    c_ref[...] = c

    # Classifier head only on the final time block (dropouts are identity in eval).
    @pl.when(tb == pl.num_programs(0) - 1)
    def _head():
        w1 = w_ref[Fp + Hp:Fp + 2 * Hp, 0:HIDP]
        w2 = w_ref[Fp + 2 * Hp:Fp + 2 * Hp + HIDP, 0:CP]
        b1 = b_ref[:, G:G + HIDP]
        b2 = b_ref[:, G + HIDP:G + HIDP + CP]
        hid = jnp.dot(h.astype(jnp.bfloat16), w1,
                      preferred_element_type=jnp.float32) + b1
        hid = jnp.maximum(hid, 0.0)
        logits = jnp.dot(hid.astype(jnp.bfloat16), w2,
                         preferred_element_type=jnp.float32) + b2
        out_ref[...] = logits.astype(out_ref.dtype)   # full (8,128) unmasked store


def _pack_params(params, Fp):
    """Pack all weights into one bf16 slab and all biases into one f32 row.

    Zero pads are exact: padded gate lanes stay 0 through the recurrence and
    padded classifier lanes stay 0 through ReLU (zero weight rows/cols).
    """
    H = params["w_hh"].shape[0]
    HID = params["w1"].shape[1]
    C = params["w2"].shape[1]

    def gate_pack(w, rows_out):                 # reorder PyTorch i,f,g,o -> i,f,o,g
        rows = w.shape[0]
        out = jnp.zeros((rows_out, 4 * HP), jnp.float32)
        for slot, src in enumerate(PACK_ORDER):
            out = out.at[:rows, slot * HP:slot * HP + H].set(
                w[:, src * H:(src + 1) * H])
        return out

    w_ih = gate_pack(params["w_ih"], Fp)        # (Fp,   4*HP)
    w_hh = gate_pack(params["w_hh"], HP)        # (HP,   4*HP)
    w1 = jnp.zeros((HP, 4 * HP), jnp.float32).at[:H, :HID].set(params["w1"])
    w2 = jnp.zeros((HIDP, 4 * HP), jnp.float32).at[:HID, :C].set(params["w2"])
    w_slab = jnp.concatenate([w_ih, w_hh, w1, w2], axis=0).astype(jnp.bfloat16)

    b_g = gate_pack(params["b"], 1)             # (1, 4*HP)
    b1 = jnp.zeros((1, HIDP), jnp.float32).at[:, :HID].set(params["b1"])
    b2 = jnp.zeros((1, CP), jnp.float32).at[:, :C].set(params["b2"])
    b_slab = jnp.concatenate([b_g, b1, b2], axis=1)      # (1, 4*HP + HIDP + CP) f32
    return w_slab, b_slab


def classificador_lstm_forward(x, len_frames_reais, params, *, t_block=16):
    """x: (B, T, F) float32; len_frames_reais: (B,) int; returns (B, C) logits."""
    B, T, F = x.shape
    C = params["w2"].shape[-1]

    Bp = ((B + SUBLANE - 1) // SUBLANE) * SUBLANE        # batch -> sublane multiple
    Fp = ((F + 15) // 16) * 16                           # keep bf16 slab rows aligned
    if T <= t_block:                                     # single time block
        Tblk = Tp = ((T + SUBLANE - 1) // SUBLANE) * SUBLANE
    else:                                                # multi-block: Tblk % 16 == 0
        Tblk = t_block
        Tp = ((T + Tblk - 1) // Tblk) * Tblk
    n_tb = Tp // Tblk

    # Zero padding is exact: padded batch rows get len 0 (stay frozen), padded
    # timesteps are past every real length, padded features hit zero weight rows.
    x_p = jnp.zeros((Bp, Tp, Fp), jnp.bfloat16).at[:B, :T, :F].set(
        x.astype(jnp.bfloat16))
    lens_p = jnp.zeros((Bp, 1), jnp.int32).at[:B, 0].set(
        len_frames_reais.astype(jnp.int32))

    w_slab, b_slab = _pack_params(params, Fp)
    w_rows = w_slab.shape[0]
    b_cols = b_slab.shape[1]

    grid_spec = pltpu.PrefetchScalarGridSpec(
        num_scalar_prefetch=0,
        grid=(n_tb,),
        in_specs=[
            pl.BlockSpec((Bp, Tblk, Fp), lambda tb: (0, tb, 0)),  # x: time-tiled
            pl.BlockSpec((Bp, 1), lambda tb: (0, 0)),             # lengths
            pl.BlockSpec((w_rows, 4 * HP), lambda tb: (0, 0)),    # packed weights
            pl.BlockSpec((1, b_cols), lambda tb: (0, 0)),         # packed biases
        ],
        out_specs=pl.BlockSpec((Bp, CP), lambda tb: (0, 0)),
        scratch_shapes=[
            pltpu.VMEM((Tblk, Bp, 4 * HP), jnp.float32),   # per-block input proj
            pltpu.VMEM((Bp, HP), jnp.float32),             # h carry
            pltpu.VMEM((Bp, HP), jnp.float32),             # c carry
        ],
    )

    out_padded = pl.pallas_call(
        _lstm_classifier_kernel,
        out_shape=jax.ShapeDtypeStruct((Bp, CP), jnp.float32),
        grid_spec=grid_spec,
        compiler_params=pltpu.CompilerParams(
            dimension_semantics=("arbitrary",)),           # time axis is sequential
    )(x_p, lens_p, w_slab, b_slab)
    return out_padded[:B, :C]                              # drop batch/lane padding


def init_params(key, feat, hidden, n_classes):
    """Deterministic synthetic parameters matching nn.LSTM / nn.Linear shapes."""
    ks = jax.random.split(key, 8)
    s_lstm = 1.0 / jnp.sqrt(hidden)
    s_l1 = 1.0 / jnp.sqrt(hidden)
    s_l2 = 1.0 / jnp.sqrt(64)
    u = lambda k, shape, s: jax.random.uniform(k, shape, jnp.float32, -s, s)
    # PyTorch stores weight_ih_l0 as (4H, F); we keep the transpose (F, 4H).
    w_ih = u(ks[0], (feat, 4 * hidden), s_lstm)
    w_hh = u(ks[1], (hidden, 4 * hidden), s_lstm)
    b_ih = u(ks[2], (1, 4 * hidden), s_lstm)
    b_hh = u(ks[3], (1, 4 * hidden), s_lstm)
    return {
        "w_ih": w_ih,
        "w_hh": w_hh,
        "b": b_ih + b_hh,
        "w1": u(ks[4], (hidden, 64), s_l1),
        "b1": u(ks[5], (1, 64), s_l1),
        "w2": u(ks[6], (64, n_classes), s_l2),
        "b2": u(ks[7], (1, n_classes), s_l2),
    }


def _reference_forward(x, lens, params):
    """Pure-JAX f32 reference (unpadded, PyTorch i,f,g,o gate order)."""
    B, T, F = x.shape
    H = params["w_hh"].shape[0]
    h = jnp.zeros((B, H), jnp.float32)
    c = jnp.zeros((B, H), jnp.float32)
    for t in range(T):
        gates = x[:, t] @ params["w_ih"] + h @ params["w_hh"] + params["b"]
        i_g = jax.nn.sigmoid(gates[:, 0 * H:1 * H])
        f_g = jax.nn.sigmoid(gates[:, 1 * H:2 * H])
        g_g = jnp.tanh(gates[:, 2 * H:3 * H])
        o_g = jax.nn.sigmoid(gates[:, 3 * H:4 * H])
        c_new = f_g * c + i_g * g_g
        h_new = o_g * jnp.tanh(c_new)
        m = (t < lens)[:, None]
        h = jnp.where(m, h_new, h)
        c = jnp.where(m, c_new, c)
    hid = jnp.maximum(h @ params["w1"] + params["b1"], 0.0)
    return hid @ params["w2"] + params["b2"]


if __name__ == "__main__":
    # Small shapes consistent with the module:
    #   len_featrures_frames=16, len_neuronios_ocultos=32, len_tipos_golpes=4
    B, T, F, H, C = 2, 8, 16, 32, 4

    key = jax.random.PRNGKey(0)
    k_x, k_p = jax.random.split(key)
    x = jax.random.normal(k_x, (B, T, F), jnp.float32)
    len_frames_reais = jnp.array([8, 5], jnp.int32)   # padded seqs, real lengths
    params = init_params(k_p, F, H, C)

    logits = classificador_lstm_forward(x, len_frames_reais, params)
    jax.block_until_ready(logits)
    assert logits.shape == (B, C)

    ref = _reference_forward(x, len_frames_reais, params)
    err = float(jnp.max(jnp.abs(logits - ref)))
    # bf16 matmul inputs with f32 accumulation: loose tolerance vs the f32 reference.
    assert jnp.allclose(logits, ref, rtol=3e-2, atol=3e-2), f"max abs err {err}"

    print("KERNEL_OK")
</pallas_src>

<mosaic_0001>
module attributes {stable_mosaic.version = 11 : i64} {
  func.func @_lstm_classifier_kernel(%arg0: i32, %arg1: memref<8x8x16xbf16, #tpu.memory_space<vmem>>, %arg2: memref<8x1xi32, #tpu.memory_space<vmem>>, %arg3: memref<400x512xbf16, #tpu.memory_space<vmem>>, %arg4: memref<1x768xf32, #tpu.memory_space<vmem>>, %arg5: memref<8x128xf32, #tpu.memory_space<vmem>>, %arg6: memref<8x8x512xf32, #tpu.memory_space<vmem>>, %arg7: memref<8x128xf32, #tpu.memory_space<vmem>>, %arg8: memref<8x128xf32, #tpu.memory_space<vmem>>) attributes {dimension_semantics = [#tpu.dimension_semantics<arbitrary>], iteration_bounds = array<i64: 1>, scalar_prefetch = 0 : i64, scratch_operands = 3 : i64, tpu.core_type = #tpu.core_type<tc>, window_params = [{transform_indices = @transform_0, window_bounds = array<i64: 8, 8, 16>}, {pipeline_mode = #tpu.pipeline_mode<synchronous>, transform_indices = @transform_1, window_bounds = array<i64: 8, 1>}, {pipeline_mode = #tpu.pipeline_mode<synchronous>, transform_indices = @transform_2, window_bounds = array<i64: 400, 512>}, {pipeline_mode = #tpu.pipeline_mode<synchronous>, transform_indices = @transform_3, window_bounds = array<i64: 1, 768>}, {pipeline_mode = #tpu.pipeline_mode<synchronous>, transform_indices = @transform_4, window_bounds = array<i64: 8, 128>}]} {
    %c0_i32 = arith.constant 0 : i32
    %0 = arith.cmpi eq, %arg0, %c0_i32 : i32
    %1 = arith.extui %0 : i1 to i32
    %c0_i32_0 = arith.constant 0 : i32
    %2 = arith.cmpi ne, %1, %c0_i32_0 : i32
    scf.if %2 {
      %cst_71 = arith.constant 0.000000e+00 : f32
      %279 = vector.broadcast %cst_71 : f32 to vector<8x128xf32>
      %c0_72 = arith.constant 0 : index
      %c0_73 = arith.constant 0 : index
      %280 = vector.load %arg7[%c0_72, %c0_73] : memref<8x128xf32, #tpu.memory_space<vmem>>, vector<8x128xf32>
      tpu.vector_store %arg7[%c0_72, %c0_73], %279 {strides = array<i32>} : memref<8x128xf32, #tpu.memory_space<vmem>>, vector<8x128xf32>,
      %cst_74 = arith.constant 0.000000e+00 : f32
      %281 = vector.broadcast %cst_74 : f32 to vector<8x128xf32>
      %c0_75 = arith.constant 0 : index
      %c0_76 = arith.constant 0 : index
      %282 = vector.load %arg8[%c0_75, %c0_76] : memref<8x128xf32, #tpu.memory_space<vmem>>, vector<8x128xf32>
      tpu.vector_store %arg8[%c0_75, %c0_76], %281 {strides = array<i32>} : memref<8x128xf32, #tpu.memory_space<vmem>>, vector<8x128xf32>,
    } else {
    }
    %c0 = arith.constant 0 : index
    %c0_1 = arith.constant 0 : index
    %3 = vector.load %arg3[%c0, %c0_1] : memref<400x512xbf16, #tpu.memory_space<vmem>>, vector<16x512xbf16>
    %c16 = arith.constant 16 : index
    %c0_2 = arith.constant 0 : index
    %4 = vector.load %arg3[%c16, %c0_2] : memref<400x512xbf16, #tpu.memory_space<vmem>>, vector<128x512xbf16>
    %c0_3 = arith.constant 0 : index
    %c0_4 = arith.constant 0 : index
    %c0_5 = arith.constant 0 : index
    %5 = vector.load %arg1[%c0_3, %c0_4, %c0_5] : memref<8x8x16xbf16, #tpu.memory_space<vmem>>, vector<8x8x16xbf16>
    %6 = vector.shape_cast %5 : vector<8x8x16xbf16> to vector<64x16xbf16>
    %cst = arith.constant dense<0.000000e+00> : vector<64x512xf32>
    %7 = tpu.matmul %6, %3, %cst {dimension_numbers = #tpu.dot_dimension_numbers<[1], [0], [0], [1], [0, 0, 1, 1], [], []>} : vector<64x16xbf16>, vector<16x512xbf16>, vector<64x512xf32> -> vector<64x512xf32>
    %c0_6 = arith.constant 0 : index
    %c0_7 = arith.constant 0 : index
    %8 = vector.load %arg4[%c0_6, %c0_7] : memref<1x768xf32, #tpu.memory_space<vmem>>, vector<1x512xf32>
    %9 = vector.broadcast %8 : vector<1x512xf32> to vector<64x512xf32>
    %10 = arith.addf %7, %9 : vector<64x512xf32>
    %11 = vector.shape_cast %10 : vector<64x512xf32> to vector<8x8x512xf32>
    %12 = vector.extract_strided_slice %11 {offsets = [0, 0, 0], sizes = [8, 1, 512], strides = [1, 1, 1]} : vector<8x8x512xf32> to vector<8x1x512xf32>
    %13 = vector.shape_cast %12 : vector<8x1x512xf32> to vector<8x512xf32>
    %c0_8 = arith.constant 0 : index
    %c0_9 = arith.constant 0 : index
    %c0_10 = arith.constant 0 : index
    %14 = vector.load %arg6[%c0_8, %c0_9, %c0_10] : memref<8x8x512xf32, #tpu.memory_space<vmem>>, vector<1x8x512xf32>
    %15 = vector.shape_cast %14 : vector<1x8x512xf32> to vector<8x512xf32>
    %16 = vector.shape_cast %13 : vector<8x512xf32> to vector<1x8x512xf32>
    tpu.vector_store %arg6[%c0_8, %c0_9, %c0_10], %16 {strides = array<i32>} : memref<8x8x512xf32, #tpu.memory_space<vmem>>, vector<1x8x512xf32>,
    %17 = vector.extract_strided_slice %11 {offsets = [0, 1, 0], sizes = [8, 1, 512], strides = [1, 1, 1]} : vector<8x8x512xf32> to vector<8x1x512xf32>
    %18 = vector.shape_cast %17 : vector<8x1x512xf32> to vector<8x512xf32>
    %c1 = arith.constant 1 : index
    %c0_11 = arith.constant 0 : index
    %c0_12 = arith.constant 0 : index
    %19 = vector.load %arg6[%c1, %c0_11, %c0_12] : memref<8x8x512xf32, #tpu.memory_space<vmem>>, vector<1x8x512xf32>
    %20 = vector.shape_cast %19 : vector<1x8x512xf32> to vector<8x512xf32>
    %21 = vector.shape_cast %18 : vector<8x512xf32> to vector<1x8x512xf32>
    tpu.vector_store %arg6[%c1, %c0_11, %c0_12], %21 {strides = array<i32>} : memref<8x8x512xf32, #tpu.memory_space<vmem>>, vector<1x8x512xf32>,
    %22 = vector.extract_strided_slice %11 {offsets = [0, 2, 0], sizes = [8, 1, 512], strides = [1, 1, 1]} : vector<8x8x512xf32> to vector<8x1x512xf32>
    %23 = vector.shape_cast %22 : vector<8x1x512xf32> to vector<8x512xf32>
    %c2 = arith.constant 2 : index
    %c0_13 = arith.constant 0 : index
    %c0_14 = arith.constant 0 : index
    %24 = vector.load %arg6[%c2, %c0_13, %c0_14] : memref<8x8x512xf32, #tpu.memory_space<vmem>>, vector<1x8x512xf32>
    %25 = vector.shape_cast %24 : vector<1x8x512xf32> to vector<8x512xf32>
    %26 = vector.shape_cast %23 : vector<8x512xf32> to vector<1x8x512xf32>
    tpu.vector_store %arg6[%c2, %c0_13, %c0_14], %26 {strides = array<i32>} : memref<8x8x512xf32, #tpu.memory_space<vmem>>, vector<1x8x512xf32>,
    %27 = vector.extract_strided_slice %11 {offsets = [0, 3, 0], sizes = [8, 1, 512], strides = [1, 1, 1]} : vector<8x8x512xf32> to vector<8x1x512xf32>
    %28 = vector.shape_cast %27 : vector<8x1x512xf32> to vector<8x512xf32>
    %c3 = arith.constant 3 : index
    %c0_15 = arith.constant 0 : index
    %c0_16 = arith.constant 0 : index
    %29 = vector.load %arg6[%c3, %c0_15, %c0_16] : memref<8x8x512xf32, #tpu.memory_space<vmem>>, vector<1x8x512xf32>
    %30 = vector.shape_cast %29 : vector<1x8x512xf32> to vector<8x512xf32>
    %31 = vector.shape_cast %28 : vector<8x512xf32> to vector<1x8x512xf32>
    tpu.vector_store %arg6[%c3, %c0_15, %c0_16], %31 {strides = array<i32>} : memref<8x8x512xf32, #tpu.memory_space<vmem>>, vector<1x8x512xf32>,
    %32 = vector.extract_strided_slice %11 {offsets = [0, 4, 0], sizes = [8, 1, 512], strides = [1, 1, 1]} : vector<8x8x512xf32> to vector<8x1x512xf32>
    %33 = vector.shape_cast %32 : vector<8x1x512xf32> to vector<8x512xf32>
    %c4 = arith.constant 4 : index
    %c0_17 = arith.constant 0 : index
    %c0_18 = arith.constant 0 : index
    %34 = vector.load %arg6[%c4, %c0_17, %c0_18] : memref<8x8x512xf32, #tpu.memory_space<vmem>>, vector<1x8x512xf32>
    %35 = vector.shape_cast %34 : vector<1x8x512xf32> to vector<8x512xf32>
    %36 = vector.shape_cast %33 : vector<8x512xf32> to vector<1x8x512xf32>
    tpu.vector_store %arg6[%c4, %c0_17, %c0_18], %36 {strides = array<i32>} : memref<8x8x512xf32, #tpu.memory_space<vmem>>, vector<1x8x512xf32>,
    %37 = vector.extract_strided_slice %11 {offsets = [0, 5, 0], sizes = [8, 1, 512], strides = [1, 1, 1]} : vector<8x8x512xf32> to vector<8x1x512xf32>
    %38 = vector.shape_cast %37 : vector<8x1x512xf32> to vector<8x512xf32>
    %c5 = arith.constant 5 : index
    %c0_19 = arith.constant 0 : index
    %c0_20 = arith.constant 0 : index
    %39 = vector.load %arg6[%c5, %c0_19, %c0_20] : memref<8x8x512xf32, #tpu.memory_space<vmem>>, vector<1x8x512xf32>
    %40 = vector.shape_cast %39 : vector<1x8x512xf32> to vector<8x512xf32>
    %41 = vector.shape_cast %38 : vector<8x512xf32> to vector<1x8x512xf32>
    tpu.vector_store %arg6[%c5, %c0_19, %c0_20], %41 {strides = array<i32>} : memref<8x8x512xf32, #tpu.memory_space<vmem>>, vector<1x8x512xf32>,
    %42 = vector.extract_strided_slice %11 {offsets = [0, 6, 0], sizes = [8, 1, 512], strides = [1, 1, 1]} : vector<8x8x512xf32> to vector<8x1x512xf32>
    %43 = vector.shape_cast %42 : vector<8x1x512xf32> to vector<8x512xf32>
    %c6 = arith.constant 6 : index
    %c0_21 = arith.constant 0 : index
    %c0_22 = arith.constant 0 : index
    %44 = vector.load %arg6[%c6, %c0_21, %c0_22] : memref<8x8x512xf32, #tpu.memory_space<vmem>>, vector<1x8x512xf32>
    %45 = vector.shape_cast %44 : vector<1x8x512xf32> to vector<8x512xf32>
    %46 = vector.shape_cast %43 : vector<8x512xf32> to vector<1x8x512xf32>
    tpu.vector_store %arg6[%c6, %c0_21, %c0_22], %46 {strides = array<i32>} : memref<8x8x512xf32, #tpu.memory_space<vmem>>, vector<1x8x512xf32>,
    %47 = vector.extract_strided_slice %11 {offsets = [0, 7, 0], sizes = [8, 1, 512], strides = [1, 1, 1]} : vector<8x8x512xf32> to vector<8x1x512xf32>
    %48 = vector.shape_cast %47 : vector<8x1x512xf32> to vector<8x512xf32>
    %c7 = arith.constant 7 : index
    %c0_23 = arith.constant 0 : index
    %c0_24 = arith.constant 0 : index
    %49 = vector.load %arg6[%c7, %c0_23, %c0_24] : memref<8x8x512xf32, #tpu.memory_space<vmem>>, vector<1x8x512xf32>
    %50 = vector.shape_cast %49 : vector<1x8x512xf32> to vector<8x512xf32>
    %51 = vector.shape_cast %48 : vector<8x512xf32> to vector<1x8x512xf32>
    tpu.vector_store %arg6[%c7, %c0_23, %c0_24], %51 {strides = array<i32>} : memref<8x8x512xf32, #tpu.memory_space<vmem>>, vector<1x8x512xf32>,
    %c0_25 = arith.constant 0 : index
    %c0_26 = arith.constant 0 : index
    %52 = vector.load %arg2[%c0_25, %c0_26] : memref<8x1xi32, #tpu.memory_space<vmem>>, vector<8x1xi32>
    %53 = vector.shape_cast %52 : vector<8x1xi32> to vector<8x1xi32>
    %54 = vector.broadcast %53 : vector<8x1xi32> to vector<8x128xi32>
    %c8_i32 = arith.constant 8 : i32
    %55 = arith.muli %arg0, %c8_i32 : i32
    %c0_27 = arith.constant 0 : index
    %c0_28 = arith.constant 0 : index
    %56 = vector.load %arg7[%c0_27, %c0_28] : memref<8x128xf32, #tpu.memory_space<vmem>>, vector<8x128xf32>
    %c0_29 = arith.constant 0 : index
    %c0_30 = arith.constant 0 : index
    %57 = vector.load %arg8[%c0_29, %c0_30] : memref<8x128xf32, #tpu.memory_space<vmem>>, vector<8x128xf32>
    %c0_i32_31 = arith.constant 0 : i32
    %58 = arith.index_cast %c0_i32_31 : i32 to index
    %c0_32 = arith.constant 0 : index
    %c0_33 = arith.constant 0 : index
    %59 = vector.load %arg6[%58, %c0_32, %c0_33] : memref<8x8x512xf32, #tpu.memory_space<vmem>>, vector<1x8x512xf32>
    %60 = vector.shape_cast %59 : vector<1x8x512xf32> to vector<8x512xf32>
    %61 = arith.truncf %56 : vector<8x128xf32> to vector<8x128xbf16>
    %cst_34 = arith.constant dense<0.000000e+00> : vector<8x512xf32>
    %62 = tpu.matmul %61, %4, %cst_34 {dimension_numbers = #tpu.dot_dimension_numbers<[1], [0], [0], [1], [0, 0, 1, 1], [], []>} : vector<8x128xbf16>, vector<128x512xbf16>, vector<8x512xf32> -> vector<8x512xf32>
    %63 = arith.addf %60, %62 : vector<8x512xf32>
    %64 = vector.extract_strided_slice %63 {offsets = [0, 0], sizes = [8, 384], strides = [1, 1]} : vector<8x512xf32> to vector<8x384xf32>
    %65 = arith.negf %64 : vector<8x384xf32>
    %66 = math.exp %65 : vector<8x384xf32>
    %cst_35 = arith.constant 1.000000e+00 : f32
    %67 = vector.broadcast %cst_35 : f32 to vector<8x384xf32>
    %68 = arith.addf %67, %66 : vector<8x384xf32>
    %69 = arith.divf %67, %68 : vector<8x384xf32>
    %70 = vector.extract_strided_slice %69 {offsets = [0, 0], sizes = [8, 128], strides = [1, 1]} : vector<8x384xf32> to vector<8x128xf32>
    %71 = vector.extract_strided_slice %69 {offsets = [0, 128], sizes = [8, 128], strides = [1, 1]} : vector<8x384xf32> to vector<8x128xf32>
    %72 = vector.extract_strided_slice %69 {offsets = [0, 256], sizes = [8, 128], strides = [1, 1]} : vector<8x384xf32> to vector<8x128xf32>
    %73 = vector.extract_strided_slice %63 {offsets = [0, 384], sizes = [8, 128], strides = [1, 1]} : vector<8x512xf32> to vector<8x128xf32>
    %74 = math.tanh %73 : vector<8x128xf32>
    %75 = arith.mulf %71, %57 : vector<8x128xf32>
    %76 = arith.mulf %70, %74 : vector<8x128xf32>
    %77 = arith.addf %75, %76 : vector<8x128xf32>
    %78 = math.tanh %77 : vector<8x128xf32>
    %79 = arith.mulf %72, %78 : vector<8x128xf32>
    %80 = arith.addi %55, %c0_i32_31 : i32
    %81 = vector.broadcast %80 : i32 to vector<8x128xi32>
    %82 = arith.cmpi slt, %81, %54 : vector<8x128xi32>
    %83 = arith.select %82, %79, %56 : vector<8x128xi1>, vector<8x128xf32>
    %84 = arith.select %82, %77, %57 : vector<8x128xi1>, vector<8x128xf32>
    %c1_i32 = arith.constant 1 : i32
    %85 = arith.index_cast %c1_i32 : i32 to index
    %c0_36 = arith.constant 0 : index
    %c0_37 = arith.constant 0 : index
    %86 = vector.load %arg6[%85, %c0_36, %c0_37] : memref<8x8x512xf32, #tpu.memory_space<vmem>>, vector<1x8x512xf32>
    %87 = vector.shape_cast %86 : vector<1x8x512xf32> to vector<8x512xf32>
    %88 = arith.truncf %83 : vector<8x128xf32> to vector<8x128xbf16>
    %cst_38 = arith.constant dense<0.000000e+00> : vector<8x512xf32>
    %89 = tpu.matmul %88, %4, %cst_38 {dimension_numbers = #tpu.dot_dimension_numbers<[1], [0], [0], [1], [0, 0, 1, 1], [], []>} : vector<8x128xbf16>, vector<128x512xbf16>, vector<8x512xf32> -> vector<8x512xf32>
    %90 = arith.addf %87, %89 : vector<8x512xf32>
    %91 = vector.extract_strided_slice %90 {offsets = [0, 0], sizes = [8, 384], strides = [1, 1]} : vector<8x512xf32> to vector<8x384xf32>
    %92 = arith.negf %91 : vector<8x384xf32>
    %93 = math.exp %92 : vector<8x384xf32>
    %cst_39 = arith.constant 1.000000e+00 : f32
    %94 = vector.broadcast %cst_39 : f32 to vector<8x384xf32>
    %95 = arith.addf %94, %93 : vector<8x384xf32>
    %96 = arith.divf %94, %95 : vector<8x384xf32>
    %97 = vector.extract_strided_slice %96 {offsets = [0, 0], sizes = [8, 128], strides = [1, 1]} : vector<8x384xf32> to vector<8x128xf32>
    %98 = vector.extract_strided_slice %96 {offsets = [0, 128], sizes = [8, 128], strides = [1, 1]} : vector<8x384xf32> to vector<8x128xf32>
    %99 = vector.extract_strided_slice %96 {offsets = [0, 256], sizes = [8, 128], strides = [1, 1]} : vector<8x384xf32> to vector<8x128xf32>
    %100 = vector.extract_strided_slice %90 {offsets = [0, 384], sizes = [8, 128], strides = [1, 1]} : vector<8x512xf32> to vector<8x128xf32>
    %101 = math.tanh %100 : vector<8x128xf32>
    %102 = arith.mulf %98, %84 : vector<8x128xf32>
    %103 = arith.mulf %97, %101 : vector<8x128xf32>
    %104 = arith.addf %102, %103 : vector<8x128xf32>
    %105 = math.tanh %104 : vector<8x128xf32>
    %106 = arith.mulf %99, %105 : vector<8x128xf32>
    %107 = arith.addi %55, %c1_i32 : i32
    %108 = vector.broadcast %107 : i32 to vector<8x128xi32>
    %109 = arith.cmpi slt, %108, %54 : vector<8x128xi32>
    %110 = arith.select %109, %106, %83 : vector<8x128xi1>, vector<8x128xf32>
    %111 = arith.select %109, %104, %84 : vector<8x128xi1>, vector<8x128xf32>
    %c2_i32 = arith.constant 2 : i32
    %112 = arith.index_cast %c2_i32 : i32 to index
    %c0_40 = arith.constant 0 : index
    %c0_41 = arith.constant 0 : index
    %113 = vector.load %arg6[%112, %c0_40, %c0_41] : memref<8x8x512xf32, #tpu.memory_space<vmem>>, vector<1x8x512xf32>
    %114 = vector.shape_cast %113 : vector<1x8x512xf32> to vector<8x512xf32>
    %115 = arith.truncf %110 : vector<8x128xf32> to vector<8x128xbf16>
    %cst_42 = arith.constant dense<0.000000e+00> : vector<8x512xf32>
    %116 = tpu.matmul %115, %4, %cst_42 {dimension_numbers = #tpu.dot_dimension_numbers<[1], [0], [0], [1], [0, 0, 1, 1], [], []>} : vector<8x128xbf16>, vector<128x512xbf16>, vector<8x512xf32> -> vector<8x512xf32>
    %117 = arith.addf %114, %116 : vector<8x512xf32>
    %118 = vector.extract_strided_slice %117 {offsets = [0, 0], sizes = [8, 384], strides = [1, 1]} : vector<8x512xf32> to vector<8x384xf32>
    %119 = arith.negf %118 : vector<8x384xf32>
    %120 = math.exp %119 : vector<8x384xf32>
    %cst_43 = arith.constant 1.000000e+00 : f32
    %121 = vector.broadcast %cst_43 : f32 to vector<8x384xf32>
    %122 = arith.addf %121, %120 : vector<8x384xf32>
    %123 = arith.divf %121, %122 : vector<8x384xf32>
    %124 = vector.extract_strided_slice %123 {offsets = [0, 0], sizes = [8, 128], strides = [1, 1]} : vector<8x384xf32> to vector<8x128xf32>
    %125 = vector.extract_strided_slice %123 {offsets = [0, 128], sizes = [8, 128], strides = [1, 1]} : vector<8x384xf32> to vector<8x128xf32>
    %126 = vector.extract_strided_slice %123 {offsets = [0, 256], sizes = [8, 128], strides = [1, 1]} : vector<8x384xf32> to vector<8x128xf32>
    %127 = vector.extract_strided_slice %117 {offsets = [0, 384], sizes = [8, 128], strides = [1, 1]} : vector<8x512xf32> to vector<8x128xf32>
    %128 = math.tanh %127 : vector<8x128xf32>
    %129 = arith.mulf %125, %111 : vector<8x128xf32>
    %130 = arith.mulf %124, %128 : vector<8x128xf32>
    %131 = arith.addf %129, %130 : vector<8x128xf32>
    %132 = math.tanh %131 : vector<8x128xf32>
    %133 = arith.mulf %126, %132 : vector<8x128xf32>
    %134 = arith.addi %55, %c2_i32 : i32
    %135 = vector.broadcast %134 : i32 to vector<8x128xi32>
    %136 = arith.cmpi slt, %135, %54 : vector<8x128xi32>
    %137 = arith.select %136, %133, %110 : vector<8x128xi1>, vector<8x128xf32>
    %138 = arith.select %136, %131, %111 : vector<8x128xi1>, vector<8x128xf32>
    %c3_i32 = arith.constant 3 : i32
    %139 = arith.index_cast %c3_i32 : i32 to index
    %c0_44 = arith.constant 0 : index
    %c0_45 = arith.constant 0 : index
    %140 = vector.load %arg6[%139, %c0_44, %c0_45] : memref<8x8x512xf32, #tpu.memory_space<vmem>>, vector<1x8x512xf32>
    %141 = vector.shape_cast %140 : vector<1x8x512xf32> to vector<8x512xf32>
    %142 = arith.truncf %137 : vector<8x128xf32> to vector<8x128xbf16>
    %cst_46 = arith.constant dense<0.000000e+00> : vector<8x512xf32>
    %143 = tpu.matmul %142, %4, %cst_46 {dimension_numbers = #tpu.dot_dimension_numbers<[1], [0], [0], [1], [0, 0, 1, 1], [], []>} : vector<8x128xbf16>, vector<128x512xbf16>, vector<8x512xf32> -> vector<8x512xf32>
    %144 = arith.addf %141, %143 : vector<8x512xf32>
    %145 = vector.extract_strided_slice %144 {offsets = [0, 0], sizes = [8, 384], strides = [1, 1]} : vector<8x512xf32> to vector<8x384xf32>
    %146 = arith.negf %145 : vector<8x384xf32>
    %147 = math.exp %146 : vector<8x384xf32>
    %cst_47 = arith.constant 1.000000e+00 : f32
    %148 = vector.broadcast %cst_47 : f32 to vector<8x384xf32>
    %149 = arith.addf %148, %147 : vector<8x384xf32>
    %150 = arith.divf %148, %149 : vector<8x384xf32>
    %151 = vector.extract_strided_slice %150 {offsets = [0, 0], sizes = [8, 128], strides = [1, 1]} : vector<8x384xf32> to vector<8x128xf32>
    %152 = vector.extract_strided_slice %150 {offsets = [0, 128], sizes = [8, 128], strides = [1, 1]} : vector<8x384xf32> to vector<8x128xf32>
    %153 = vector.extract_strided_slice %150 {offsets = [0, 256], sizes = [8, 128], strides = [1, 1]} : vector<8x384xf32> to vector<8x128xf32>
    %154 = vector.extract_strided_slice %144 {offsets = [0, 384], sizes = [8, 128], strides = [1, 1]} : vector<8x512xf32> to vector<8x128xf32>
    %155 = math.tanh %154 : vector<8x128xf32>
    %156 = arith.mulf %152, %138 : vector<8x128xf32>
    %157 = arith.mulf %151, %155 : vector<8x128xf32>
    %158 = arith.addf %156, %157 : vector<8x128xf32>
    %159 = math.tanh %158 : vector<8x128xf32>
    %160 = arith.mulf %153, %159 : vector<8x128xf32>
    %161 = arith.addi %55, %c3_i32 : i32
    %162 = vector.broadcast %161 : i32 to vector<8x128xi32>
    %163 = arith.cmpi slt, %162, %54 : vector<8x128xi32>
    %164 = arith.select %163, %160, %137 : vector<8x128xi1>, vector<8x128xf32>
    %165 = arith.select %163, %158, %138 : vector<8x128xi1>, vector<8x128xf32>
    %c4_i32 = arith.constant 4 : i32
    %166 = arith.index_cast %c4_i32 : i32 to index
    %c0_48 = arith.constant 0 : index
    %c0_49 = arith.constant 0 : index
    %167 = vector.load %arg6[%166, %c0_48, %c0_49] : memref<8x8x512xf32, #tpu.memory_space<vmem>>, vector<1x8x512xf32>
    %168 = vector.shape_cast %167 : vector<1x8x512xf32> to vector<8x512xf32>
    %169 = arith.truncf %164 : vector<8x128xf32> to vector<8x128xbf16>
    %cst_50 = arith.constant dense<0.000000e+00> : vector<8x512xf32>
    %170 = tpu.matmul %169, %4, %cst_50 {dimension_numbers = #tpu.dot_dimension_numbers<[1], [0], [0], [1], [0, 0, 1, 1], [], []>} : vector<8x128xbf16>, vector<128x512xbf16>, vector<8x512xf32> -> vector<8x512xf32>
    %171 = arith.addf %168, %170 : vector<8x512xf32>
    %172 = vector.extract_strided_slice %171 {offsets = [0, 0], sizes = [8, 384], strides = [1, 1]} : vector<8x512xf32> to vector<8x384xf32>
    %173 = arith.negf %172 : vector<8x384xf32>
    %174 = math.exp %173 : vector<8x384xf32>
    %cst_51 = arith.constant 1.000000e+00 : f32
    %175 = vector.broadcast %cst_51 : f32 to vector<8x384xf32>
    %176 = arith.addf %175, %174 : vector<8x384xf32>
    %177 = arith.divf %175, %176 : vector<8x384xf32>
    %178 = vector.extract_strided_slice %177 {offsets = [0, 0], sizes = [8, 128], strides = [1, 1]} : vector<8x384xf32> to vector<8x128xf32>
    %179 = vector.extract_strided_slice %177 {offsets = [0, 128], sizes = [8, 128], strides = [1, 1]} : vector<8x384xf32> to vector<8x128xf32>
    %180 = vector.extract_strided_slice %177 {offsets = [0, 256], sizes = [8, 128], strides = [1, 1]} : vector<8x384xf32> to vector<8x128xf32>
    %181 = vector.extract_strided_slice %171 {offsets = [0, 384], sizes = [8, 128], strides = [1, 1]} : vector<8x512xf32> to vector<8x128xf32>
    %182 = math.tanh %181 : vector<8x128xf32>
    %183 = arith.mulf %179, %165 : vector<8x128xf32>
    %184 = arith.mulf %178, %182 : vector<8x128xf32>
    %185 = arith.addf %183, %184 : vector<8x128xf32>
    %186 = math.tanh %185 : vector<8x128xf32>
    %187 = arith.mulf %180, %186 : vector<8x128xf32>
    %188 = arith.addi %55, %c4_i32 : i32
    %189 = vector.broadcast %188 : i32 to vector<8x128xi32>
    %190 = arith.cmpi slt, %189, %54 : vector<8x128xi32>
    %191 = arith.select %190, %187, %164 : vector<8x128xi1>, vector<8x128xf32>
    %192 = arith.select %190, %185, %165 : vector<8x128xi1>, vector<8x128xf32>
    %c5_i32 = arith.constant 5 : i32
    %193 = arith.index_cast %c5_i32 : i32 to index
    %c0_52 = arith.constant 0 : index
    %c0_53 = arith.constant 0 : index
    %194 = vector.load %arg6[%193, %c0_52, %c0_53] : memref<8x8x512xf32, #tpu.memory_space<vmem>>, vector<1x8x512xf32>
    %195 = vector.shape_cast %194 : vector<1x8x512xf32> to vector<8x512xf32>
    %196 = arith.truncf %191 : vector<8x128xf32> to vector<8x128xbf16>
    %cst_54 = arith.constant dense<0.000000e+00> : vector<8x512xf32>
    %197 = tpu.matmul %196, %4, %cst_54 {dimension_numbers = #tpu.dot_dimension_numbers<[1], [0], [0], [1], [0, 0, 1, 1], [], []>} : vector<8x128xbf16>, vector<128x512xbf16>, vector<8x512xf32> -> vector<8x512xf32>
    %198 = arith.addf %195, %197 : vector<8x512xf32>
    %199 = vector.extract_strided_slice %198 {offsets = [0, 0], sizes = [8, 384], strides = [1, 1]} : vector<8x512xf32> to vector<8x384xf32>
    %200 = arith.negf %199 : vector<8x384xf32>
    %201 = math.exp %200 : vector<8x384xf32>
    %cst_55 = arith.constant 1.000000e+00 : f32
    %202 = vector.broadcast %cst_55 : f32 to vector<8x384xf32>
    %203 = arith.addf %202, %201 : vector<8x384xf32>
    %204 = arith.divf %202, %203 : vector<8x384xf32>
    %205 = vector.extract_strided_slice %204 {offsets = [0, 0], sizes = [8, 128], strides = [1, 1]} : vector<8x384xf32> to vector<8x128xf32>
    %206 = vector.extract_strided_slice %204 {offsets = [0, 128], sizes = [8, 128], strides = [1, 1]} : vector<8x384xf32> to vector<8x128xf32>
    %207 = vector.extract_strided_slice %204 {offsets = [0, 256], sizes = [8, 128], strides = [1, 1]} : vector<8x384xf32> to vector<8x128xf32>
    %208 = vector.extract_strided_slice %198 {offsets = [0, 384], sizes = [8, 128], strides = [1, 1]} : vector<8x512xf32> to vector<8x128xf32>
    %209 = math.tanh %208 : vector<8x128xf32>
    %210 = arith.mulf %206, %192 : vector<8x128xf32>
    %211 = arith.mulf %205, %209 : vector<8x128xf32>
    %212 = arith.addf %210, %211 : vector<8x128xf32>
    %213 = math.tanh %212 : vector<8x128xf32>
    %214 = arith.mulf %207, %213 : vector<8x128xf32>
    %215 = arith.addi %55, %c5_i32 : i32
    %216 = vector.broadcast %215 : i32 to vector<8x128xi32>
    %217 = arith.cmpi slt, %216, %54 : vector<8x128xi32>
    %218 = arith.select %217, %214, %191 : vector<8x128xi1>, vector<8x128xf32>
    %219 = arith.select %217, %212, %192 : vector<8x128xi1>, vector<8x128xf32>
    %c6_i32 = arith.constant 6 : i32
    %220 = arith.index_cast %c6_i32 : i32 to index
    %c0_56 = arith.constant 0 : index
    %c0_57 = arith.constant 0 : index
    %221 = vector.load %arg6[%220, %c0_56, %c0_57] : memref<8x8x512xf32, #tpu.memory_space<vmem>>, vector<1x8x512xf32>
    %222 = vector.shape_cast %221 : vector<1x8x512xf32> to vector<8x512xf32>
    %223 = arith.truncf %218 : vector<8x128xf32> to vector<8x128xbf16>
    %cst_58 = arith.constant dense<0.000000e+00> : vector<8x512xf32>
    %224 = tpu.matmul %223, %4, %cst_58 {dimension_numbers = #tpu.dot_dimension_numbers<[1], [0], [0], [1], [0, 0, 1, 1], [], []>} : vector<8x128xbf16>, vector<128x512xbf16>, vector<8x512xf32> -> vector<8x512xf32>
    %225 = arith.addf %222, %224 : vector<8x512xf32>
    %226 = vector.extract_strided_slice %225 {offsets = [0, 0], sizes = [8, 384], strides = [1, 1]} : vector<8x512xf32> to vector<8x384xf32>
    %227 = arith.negf %226 : vector<8x384xf32>
    %228 = math.exp %227 : vector<8x384xf32>
    %cst_59 = arith.constant 1.000000e+00 : f32
    %229 = vector.broadcast %cst_59 : f32 to vector<8x384xf32>
    %230 = arith.addf %229, %228 : vector<8x384xf32>
    %231 = arith.divf %229, %230 : vector<8x384xf32>
    %232 = vector.extract_strided_slice %231 {offsets = [0, 0], sizes = [8, 128], strides = [1, 1]} : vector<8x384xf32> to vector<8x128xf32>
    %233 = vector.extract_strided_slice %231 {offsets = [0, 128], sizes = [8, 128], strides = [1, 1]} : vector<8x384xf32> to vector<8x128xf32>
    %234 = vector.extract_strided_slice %231 {offsets = [0, 256], sizes = [8, 128], strides = [1, 1]} : vector<8x384xf32> to vector<8x128xf32>
    %235 = vector.extract_strided_slice %225 {offsets = [0, 384], sizes = [8, 128], strides = [1, 1]} : vector<8x512xf32> to vector<8x128xf32>
    %236 = math.tanh %235 : vector<8x128xf32>
    %237 = arith.mulf %233, %219 : vector<8x128xf32>
    %238 = arith.mulf %232, %236 : vector<8x128xf32>
    %239 = arith.addf %237, %238 : vector<8x128xf32>
    %240 = math.tanh %239 : vector<8x128xf32>
    %241 = arith.mulf %234, %240 : vector<8x128xf32>
    %242 = arith.addi %55, %c6_i32 : i32
    %243 = vector.broadcast %242 : i32 to vector<8x128xi32>
    %244 = arith.cmpi slt, %243, %54 : vector<8x128xi32>
    %245 = arith.select %244, %241, %218 : vector<8x128xi1>, vector<8x128xf32>
    %246 = arith.select %244, %239, %219 : vector<8x128xi1>, vector<8x128xf32>
    %c7_i32 = arith.constant 7 : i32
    %247 = arith.index_cast %c7_i32 : i32 to index
    %c0_60 = arith.constant 0 : index
    %c0_61 = arith.constant 0 : index
    %248 = vector.load %arg6[%247, %c0_60, %c0_61] : memref<8x8x512xf32, #tpu.memory_space<vmem>>, vector<1x8x512xf32>
    %249 = vector.shape_cast %248 : vector<1x8x512xf32> to vector<8x512xf32>
    %250 = arith.truncf %245 : vector<8x128xf32> to vector<8x128xbf16>
    %cst_62 = arith.constant dense<0.000000e+00> : vector<8x512xf32>
    %251 = tpu.matmul %250, %4, %cst_62 {dimension_numbers = #tpu.dot_dimension_numbers<[1], [0], [0], [1], [0, 0, 1, 1], [], []>} : vector<8x128xbf16>, vector<128x512xbf16>, vector<8x512xf32> -> vector<8x512xf32>
    %252 = arith.addf %249, %251 : vector<8x512xf32>
    %253 = vector.extract_strided_slice %252 {offsets = [0, 0], sizes = [8, 384], strides = [1, 1]} : vector<8x512xf32> to vector<8x384xf32>
    %254 = arith.negf %253 : vector<8x384xf32>
    %255 = math.exp %254 : vector<8x384xf32>
    %cst_63 = arith.constant 1.000000e+00 : f32
    %256 = vector.broadcast %cst_63 : f32 to vector<8x384xf32>
    %257 = arith.addf %256, %255 : vector<8x384xf32>
    %258 = arith.divf %256, %257 : vector<8x384xf32>
    %259 = vector.extract_strided_slice %258 {offsets = [0, 0], sizes = [8, 128], strides = [1, 1]} : vector<8x384xf32> to vector<8x128xf32>
    %260 = vector.extract_strided_slice %258 {offsets = [0, 128], sizes = [8, 128], strides = [1, 1]} : vector<8x384xf32> to vector<8x128xf32>
    %261 = vector.extract_strided_slice %258 {offsets = [0, 256], sizes = [8, 128], strides = [1, 1]} : vector<8x384xf32> to vector<8x128xf32>
    %262 = vector.extract_strided_slice %252 {offsets = [0, 384], sizes = [8, 128], strides = [1, 1]} : vector<8x512xf32> to vector<8x128xf32>
    %263 = math.tanh %262 : vector<8x128xf32>
    %264 = arith.mulf %260, %246 : vector<8x128xf32>
    %265 = arith.mulf %259, %263 : vector<8x128xf32>
    %266 = arith.addf %264, %265 : vector<8x128xf32>
    %267 = math.tanh %266 : vector<8x128xf32>
    %268 = arith.mulf %261, %267 : vector<8x128xf32>
    %269 = arith.addi %55, %c7_i32 : i32
    %270 = vector.broadcast %269 : i32 to vector<8x128xi32>
    %271 = arith.cmpi slt, %270, %54 : vector<8x128xi32>
    %272 = arith.select %271, %268, %245 : vector<8x128xi1>, vector<8x128xf32>
    %273 = arith.select %271, %266, %246 : vector<8x128xi1>, vector<8x128xf32>
    %c8_i32_64 = arith.constant 8 : i32
    %c0_65 = arith.constant 0 : index
    %c0_66 = arith.constant 0 : index
    %274 = vector.load %arg7[%c0_65, %c0_66] : memref<8x128xf32, #tpu.memory_space<vmem>>, vector<8x128xf32>
    tpu.vector_store %arg7[%c0_65, %c0_66], %272 {strides = array<i32>} : memref<8x128xf32, #tpu.memory_space<vmem>>, vector<8x128xf32>,
    %c0_67 = arith.constant 0 : index
    %c0_68 = arith.constant 0 : index
    %275 = vector.load %arg8[%c0_67, %c0_68] : memref<8x128xf32, #tpu.memory_space<vmem>>, vector<8x128xf32>
    tpu.vector_store %arg8[%c0_67, %c0_68], %273 {strides = array<i32>} : memref<8x128xf32, #tpu.memory_space<vmem>>, vector<8x128xf32>,
    %c0_i32_69 = arith.constant 0 : i32
    %276 = arith.cmpi eq, %arg0, %c0_i32_69 : i32
    %277 = arith.extui %276 : i1 to i32
    %c0_i32_70 = arith.constant 0 : i32
    %278 = arith.cmpi ne, %277, %c0_i32_70 : i32
    scf.if %278 {
      %c144 = arith.constant 144 : index
      %c0_71 = arith.constant 0 : index
      %279 = vector.load %arg3[%c144, %c0_71] : memref<400x512xbf16, #tpu.memory_space<vmem>>, vector<128x128xbf16>
      %c272 = arith.constant 272 : index
      %c0_72 = arith.constant 0 : index
      %280 = vector.load %arg3[%c272, %c0_72] : memref<400x512xbf16, #tpu.memory_space<vmem>>, vector<128x128xbf16>
      %c0_73 = arith.constant 0 : index
      %c512 = arith.constant 512 : index
      %281 = vector.load %arg4[%c0_73, %c512] : memref<1x768xf32, #tpu.memory_space<vmem>>, vector<1x128xf32>
      %c0_74 = arith.constant 0 : index
      %c640 = arith.constant 640 : index
      %282 = vector.load %arg4[%c0_74, %c640] : memref<1x768xf32, #tpu.memory_space<vmem>>, vector<1x128xf32>
      %283 = arith.truncf %272 : vector<8x128xf32> to vector<8x128xbf16>
      %cst_75 = arith.constant dense<0.000000e+00> : vector<8x128xf32>
      %284 = tpu.matmul %283, %279, %cst_75 {dimension_numbers = #tpu.dot_dimension_numbers<[1], [0], [0], [1], [0, 0, 1, 1], [], []>} : vector<8x128xbf16>, vector<128x128xbf16>, vector<8x128xf32> -> vector<8x128xf32>
      %285 = vector.broadcast %281 : vector<1x128xf32> to vector<8x128xf32>
      %286 = arith.addf %284, %285 : vector<8x128xf32>
      %cst_76 = arith.constant 0.000000e+00 : f32
      %287 = vector.broadcast %cst_76 : f32 to vector<8x128xf32>
      %288 = arith.maximumf %286, %287 : vector<8x128xf32>
      %289 = arith.truncf %288 : vector<8x128xf32> to vector<8x128xbf16>
      %cst_77 = arith.constant dense<0.000000e+00> : vector<8x128xf32>
      %290 = tpu.matmul %289, %280, %cst_77 {dimension_numbers = #tpu.dot_dimension_numbers<[1], [0], [0], [1], [0, 0, 1, 1], [], []>} : vector<8x128xbf16>, vector<128x128xbf16>, vector<8x128xf32> -> vector<8x128xf32>
      %291 = vector.broadcast %282 : vector<1x128xf32> to vector<8x128xf32>
      %292 = arith.addf %290, %291 : vector<8x128xf32>
      %c0_78 = arith.constant 0 : index
      %c0_79 = arith.constant 0 : index
      %293 = vector.load %arg5[%c0_78, %c0_79] : memref<8x128xf32, #tpu.memory_space<vmem>>, vector<8x128xf32>
      tpu.vector_store %arg5[%c0_78, %c0_79], %292 {strides = array<i32>} : memref<8x128xf32, #tpu.memory_space<vmem>>, vector<8x128xf32>,
    } else {
    }
    return
  }
  func.func @transform_0(%arg0: i32) -> (i32, i32, i32) {
    %c0_i32 = arith.constant 0 : i32
    %c0_i32_0 = arith.constant 0 : i32
    %c0_i32_1 = arith.constant 0 : i32
    return %c0_i32, %arg0, %c0_i32_0 : i32, i32, i32
  }
  func.func @transform_1(%arg0: i32) -> (i32, i32) {
    %c0_i32 = arith.constant 0 : i32
    %c0_i32_0 = arith.constant 0 : i32
    %c0_i32_1 = arith.constant 0 : i32
    return %c0_i32, %c0_i32_0 : i32, i32
  }
  func.func @transform_2(%arg0: i32) -> (i32, i32) {
    %c0_i32 = arith.constant 0 : i32
    %c0_i32_0 = arith.constant 0 : i32
    %c0_i32_1 = arith.constant 0 : i32
    return %c0_i32, %c0_i32_0 : i32, i32
  }
  func.func @transform_3(%arg0: i32) -> (i32, i32) {
    %c0_i32 = arith.constant 0 : i32
    %c0_i32_0 = arith.constant 0 : i32
    %c0_i32_1 = arith.constant 0 : i32
    return %c0_i32, %c0_i32_0 : i32, i32
  }
  func.func @transform_4(%arg0: i32) -> (i32, i32) {
    %c0_i32 = arith.constant 0 : i32
    %c0_i32_0 = arith.constant 0 : i32
    %c0_i32_1 = arith.constant 0 : i32
    return %c0_i32, %c0_i32_0 : i32, i32
  }
}

</mosaic_0001>

<llo_original>
// kernel: tpu_custom_call.1
$region0: #{tpu_custom_call.1}
  #allocation0 [shape = 'u32[]', space=smem, size = 0x4, offset = 0x4, fixed_abs, tag = 'smem constant byte address 0x4 - core index']
  #allocation1 [shape = 'u32[144,128]{1,0:T(1,128)}', space=vmem, size = 0x12000, scoped, tag = 'internal scratch']
  #allocation2 [shape = 'f32[8,8,512]{2,1,0:T(8,128)}', space=vmem, size = 0x20000, scoped, tag = 'scratch operand']
  #allocation3 [shape = 'f32[8,128]{1,0:T(8,128)}', space=vmem, size = 0x1000, scoped, tag = 'scratch operand']
  #allocation4 [shape = 'f32[8,128]{1,0:T(8,128)}', space=vmem, size = 0x1000, scoped, tag = 'scratch operand']
  %s0 = inlined_call_operand.hbm [shape: bf16[8,8,16], index: 0, kind: input, shape index: {}]
  %s1 = inlined_call_operand.vmem [shape: s32[8,1], index: 1, kind: input, shape index: {}]
  %s2 = inlined_call_operand.hbm [shape: bf16[400,512], index: 2, kind: input, shape index: {}]
  %s3 = inlined_call_operand.vmem [shape: f32[1,768], index: 3, kind: input, shape index: {}]
  %s4 = inlined_call_operand.hbm [shape: f32[8,128], index: 4, kind: output, shape index: {}]
  %s5 = sld [smem:[#allocation0]]
  $region42: #{tpu_custom_call.1} parent=0
    _
  %s7 = ssub.s32 1, %s5
  %s8 = scalar_select 0, %s7, %s5
  $region1: #{tpu_custom_call.1} parent=0
    #allocation5 [shape = 'u8[16384]{0}', space=vmem, size = 0x4000, scoped, tag = 'input window, operand 0, single buffered']
    #allocation6 [shape = 's32[1]{0}', space=sflag, size = 0x4, scoped, tag = 'scoped memory for tpu_custom_call.1']
    #allocation7 [shape = 's32[1]{0}', space=sflag, size = 0x4, scoped, tag = 'scoped memory for tpu_custom_call.1']
    #allocation8 [shape = 'u8[409600]{0}', space=vmem, size = 0x64000, scoped, tag = 'input window, operand 2, single buffered']
    #allocation9 [shape = 's32[1]{0}', space=sflag, size = 0x4, scoped, tag = 'scoped memory for tpu_custom_call.1']
    #allocation10 [shape = 'u8[4096]{0}', space=vmem, size = 0x1000, scoped, tag = 'output window, operand 0, single buffered']
    %9 = vsyncpa [#allocation6], 0
    %10 = vsyncpa [#allocation9], 0
    %11 = vsyncpa [#allocation7], 0
    // Predicated region
    $region2: #{tpu_custom_call.1} parent=1 // pred_check
      _
    $region3: #{tpu_custom_call.1} parent=1 // pred_check_branch
      %13 = sbr.rel (0) target = $region5
    $region4: #{tpu_custom_call.1} parent=1 // pred_region
      %s15 = ssub.s32 512, 512
      %16 = vsyncadd [#allocation6], %s15
      %s17 = sshll.u32 [#allocation5], 4
      %s18 = int_to_ptr.vmem [resolvable:$true] %s17
      %23 = dma.hbm_to_vmem [thread:$0]  %s0, 512, %s18, [#allocation6], 64, 64, 4
    $region5: #{tpu_custom_call.1} parent=1 // pred_fallthru
      _
    // Predicated region
    $region6: #{tpu_custom_call.1} parent=1 // pred_check
      _
    $region7: #{tpu_custom_call.1} parent=1 // pred_check_branch
      %25 = sbr.rel (0) target = $region9
    $region8: #{tpu_custom_call.1} parent=1 // pred_region
      _
    $region9: #{tpu_custom_call.1} parent=1 // pred_fallthru
      _
    // Predicated region
    $region10: #{tpu_custom_call.1} parent=1 // pred_check
      _
    $region11: #{tpu_custom_call.1} parent=1 // pred_check_branch
      %27 = sbr.rel (0) target = $region13
    $region12: #{tpu_custom_call.1} parent=1 // pred_region
      %s29 = ssub.s32 12800, 12800
      %30 = vsyncadd [#allocation9], %s29
      %s31 = sshll.u32 [#allocation8], 4
      %s32 = int_to_ptr.vmem [resolvable:$true] %s31
      %37 = dma.hbm_to_vmem [thread:$0]  %s2, 12800, %s32, [#allocation9], 256, 256, 16
    $region13: #{tpu_custom_call.1} parent=1 // pred_fallthru
      _
    // Predicated region
    $region14: #{tpu_custom_call.1} parent=1 // pred_check
      _
    $region15: #{tpu_custom_call.1} parent=1 // pred_check_branch
      %39 = sbr.rel (0) target = $region17
    $region16: #{tpu_custom_call.1} parent=1 // pred_region
      _
    $region17: #{tpu_custom_call.1} parent=1 // pred_fallthru
      _
    // Predicated region
    $region18: #{tpu_custom_call.1} parent=1 // pred_check
      _
    $region19: #{tpu_custom_call.1} parent=1 // pred_check_branch
      %41 = sbr.rel (0) target = $region21
    $region20: #{tpu_custom_call.1} parent=1 // pred_region
      %42 = dma.done [#allocation6], 512
    $region21: #{tpu_custom_call.1} parent=1 // pred_fallthru
      _
    // Predicated region
    $region22: #{tpu_custom_call.1} parent=1 // pred_check
      _
    $region23: #{tpu_custom_call.1} parent=1 // pred_check_branch
      %44 = sbr.rel (0) target = $region25
    $region24: #{tpu_custom_call.1} parent=1 // pred_region
      %45 = dma.done [#allocation9], 12800
    $region25: #{tpu_custom_call.1} parent=1 // pred_fallthru
      _
    %p47 = scmp.eq.s32.totalorder 0, 0
    // Predicated region
    $region26: #{tpu_custom_call.1} parent=1 // pred_check
      %p48 = pneg %p47
    $region27: #{tpu_custom_call.1} parent=1 // pred_check_branch
      %50 = sbr.rel (%p48) target = $region29
    $region28: #{tpu_custom_call.1} parent=1 // pred_region
      %51 = vst [vmem:[#allocation3] sm:$0xff] 0.0
      %52 = vst [vmem:[#allocation4] sm:$0xff] 0.0
    $region29: #{tpu_custom_call.1} parent=1 // pred_fallthru
      _
    %v53 = vld [vmem:[#allocation8] sm:$0xff]
    %v54 = vld [vmem:[#allocation8 + $0x8] sm:$0xff]
    %v55 = vld [vmem:[#allocation8 + $0x10] sm:$0xff]
    %v56 = vld [vmem:[#allocation8 + $0x18] sm:$0xff]
    %v57 = vld [vmem:[#allocation8 + $0x20] sm:$0xff]
    %v58 = vld [vmem:[#allocation8 + $0x28] sm:$0xff]
    %v59 = vld [vmem:[#allocation8 + $0x30] sm:$0xff]
    %v60 = vld [vmem:[#allocation8 + $0x38] sm:$0xff]
    %v61 = vld [vmem:[#allocation8 + $0x40] sm:$0xff]
    %v62 = vld [vmem:[#allocation8 + $0x48] sm:$0xff]
    %v63 = vld [vmem:[#allocation8 + $0x50] sm:$0xff]
    %v64 = vld [vmem:[#allocation8 + $0x58] sm:$0xff]
    %v65 = vld [vmem:[#allocation8 + $0x60] sm:$0xff]
    %v66 = vld [vmem:[#allocation8 + $0x68] sm:$0xff]
    %v67 = vld [vmem:[#allocation8 + $0x70] sm:$0xff]
    %v68 = vld [vmem:[#allocation8 + $0x78] sm:$0xff]
    %v69 = vld [vmem:[#allocation8 + $0x80] sm:$0xff]
    %v70 = vld [vmem:[#allocation8 + $0x88] sm:$0xff]
    %v71 = vld [vmem:[#allocation8 + $0x90] sm:$0xff]
    %v72 = vld [vmem:[#allocation8 + $0x98] sm:$0xff]
    %v73 = vld [vmem:[#allocation8 + $0xa0] sm:$0xff]
    %v74 = vld [vmem:[#allocation8 + $0xa8] sm:$0xff]
    %v75 = vld [vmem:[#allocation8 + $0xb0] sm:$0xff]
    %v76 = vld [vmem:[#allocation8 + $0xb8] sm:$0xff]
    %v77 = vld [vmem:[#allocation8 + $0xc0] sm:$0xff]
    %v78 = vld [vmem:[#allocation8 + $0xc8] sm:$0xff]
    %v79 = vld [vmem:[#allocation8 + $0xd0] sm:$0xff]
    %v80 = vld [vmem:[#allocation8 + $0xd8] sm:$0xff]
    %v81 = vld [vmem:[#allocation8 + $0xe0] sm:$0xff]
    %v82 = vld [vmem:[#allocation8 + $0xe8] sm:$0xff]
    %v83 = vld [vmem:[#allocation8 + $0xf0] sm:$0xff]
    %v84 = vld [vmem:[#allocation8 + $0xf8] sm:$0xff]
    %v85 = vld [vmem:[#allocation8 + $0x100] sm:$0xff]
    %v86 = vld [vmem:[#allocation8 + $0x108] sm:$0xff]
    %v87 = vld [vmem:[#allocation8 + $0x110] sm:$0xff]
    %v88 = vld [vmem:[#allocation8 + $0x118] sm:$0xff]
    %v89 = vld [vmem:[#allocation5] sm:$0xf]
    %v90 = vld [vmem:[#allocation5 + $0x4] sm:$0xf]
    %v91 = vld [vmem:[#allocation5 + $0x8] sm:$0xf]
    %v92 = vld [vmem:[#allocation5 + $0xc] sm:$0xf]
    %v93 = vld [vmem:[#allocation5 + $0x10] sm:$0xf]
    %v94 = vld [vmem:[#allocation5 + $0x14] sm:$0xf]
    %v95 = vld [vmem:[#allocation5 + $0x18] sm:$0xf]
    %v96 = vld [vmem:[#allocation5 + $0x1c] sm:$0xf]
    %v97 = vld [vmem:[%s3] sm:$0xf]
    %v99 = vlaneseq
    %v100 = vshrl.u32 %v99, 7
    %v101 = vsub.s32 0, %v100
    %v102 = vrot.slane %v97, %v101
    %v103 = vlaneseq
    %v104 = vshrl.u32 %v103, 7
    %v105 = vsub.s32 1, %v104
    %v106 = vrot.slane %v97, %v105
    %v107 = vlaneseq
    %v108 = vshrl.u32 %v107, 7
    %v109 = vsub.s32 2, %v108
    %v110 = vrot.slane %v97, %v109
    %v111 = vlaneseq
    %v112 = vshrl.u32 %v111, 7
    %v113 = vsub.s32 3, %v112
    %v114 = vrot.slane %v97, %v113
    %v127 = vunpack.c.l.b16 %v89
    %v128 = vunpack.c.l.b16 %v90
    %v129 = vunpack.c.l.b16 %v91
    %v130 = vunpack.c.l.b16 %v92
    %v131 = vunpack.c.l.b16 %v93
    %v132 = vunpack.c.l.b16 %v94
    %v133 = vunpack.c.l.b16 %v95
    %v134 = vunpack.c.l.b16 %v96
    %v135 = vpack.c.b16 %v128, %v127
    %v136 = vpack.c.b16 %v130, %v129
    %v137 = vpack.c.b16 %v132, %v131
    %v138 = vpack.c.b16 %v134, %v133
    %v143 = vunpack.c.l.b16 %v53
    %v144 = vunpack.c.h.b16 %v53
    %v145 = vunpack.c.l.b16 %v54
    %v146 = vunpack.c.h.b16 %v54
    %v147 = vunpack.c.l.b16 %v55
    %v148 = vunpack.c.h.b16 %v55
    %v149 = vunpack.c.l.b16 %v56
    %v150 = vunpack.c.h.b16 %v56
    %v151 = vpack.c.b16 %v147, %v143
    %v152 = vpack.c.b16 %v148, %v144
    %v153 = vpack.c.b16 %v149, %v145
    %v154 = vpack.c.b16 %v150, %v146
    %vm159 = vcmask 130048
    %v161 = vsel %vm159, %v135, 0
    %v164 = vsel %vm159, %v136, 0
    %v167 = vsel %vm159, %v137, 0
    %v170 = vsel %vm159, %v138, 0
    %172 = vmatprep.subr.bf16.mxu0 0
    %173 = vmatpush1.bf16.msra.mxu0 0
    %174 = vmatprep.subr.bf16.mxu0 0
    %175 = vmatpush1.bf16.msra.mxu0 0
    %176 = vmatprep.subr.bf16.mxu0 0
    %177 = vmatpush1.bf16.msra.mxu0 0
    %178 = vmatprep.subr.bf16.mxu0 0
    %179 = vmatpush1.bf16.msra.mxu0 0
    %180 = vmatprep.subr.bf16.mxu0 0
    %181 = vmatpush1.bf16.msra.mxu0 0
    %182 = vmatprep.subr.bf16.mxu0 0
    %183 = vmatpush1.bf16.msra.mxu0 0
    %184 = vmatprep.subr.bf16.mxu0 0
    %185 = vmatpush1.bf16.msra.mxu0 0
    %186 = vmatprep.subr.bf16.mxu0 %v152
    %187 = vmatpush1.bf16.msra.mxu0 %v151
    %188 = vmatprep.subr.bf16.mxu0 0
    %189 = vmatpush2.bf16.msra.mxu0 0
    %190 = vmatprep.subr.bf16.mxu0 0
    %191 = vmatpush2.bf16.msra.mxu0 0
    %192 = vmatprep.subr.bf16.mxu0 0
    %193 = vmatpush2.bf16.msra.mxu0 0
    %194 = vmatprep.subr.bf16.mxu0 0
    %195 = vmatpush2.bf16.msra.mxu0 0
    %196 = vmatprep.subr.bf16.mxu0 0
    %197 = vmatpush2.bf16.msra.mxu0 0
    %198 = vmatprep.subr.bf16.mxu0 0
    %199 = vmatpush2.bf16.msra.mxu0 0
    %200 = vmatprep.subr.bf16.mxu0 0
    %201 = vmatpush2.bf16.msra.mxu0 0
    %202 = vmatprep.subr.bf16.mxu0 0
    %203 = vmatpush2.bf16.msra.mxu0 0
    %204 = vmatprep.mubr.bf16.mxu0 0
    %205 = vmatmul.mubr.bf16.gmra.mxu0 %v161
    %v206 = vpop.f32.mrf.mxu0
    %v207 = vadd.f32 %v102, %v206
    %v208 = vpop.f32.mrf.mxu0
    %v209 = vadd.f32 %v106, %v208
    %v210 = vpop.f32.mrf.mxu0
    %v211 = vadd.f32 %v102, %v210
    %v212 = vpop.f32.mrf.mxu0
    %v213 = vadd.f32 %v106, %v212
    %214 = vmatprep.mubr.bf16.mxu0 0
    %215 = vmatmul.mubr.bf16.gmra.mxu0 %v164
    %v216 = vpop.f32.mrf.mxu0
    %v217 = vadd.f32 %v102, %v216
    %v218 = vpop.f32.mrf.mxu0
    %v219 = vadd.f32 %v106, %v218
    %v220 = vpop.f32.mrf.mxu0
    %v221 = vadd.f32 %v102, %v220
    %v222 = vpop.f32.mrf.mxu0
    %v223 = vadd.f32 %v106, %v222
    %224 = vmatprep.mubr.bf16.mxu0 0
    %225 = vmatmul.mubr.bf16.gmra.mxu0 %v167
    %v226 = vpop.f32.mrf.mxu0
    %v227 = vadd.f32 %v102, %v226
    %v228 = vpop.f32.mrf.mxu0
    %v229 = vadd.f32 %v106, %v228
    %v230 = vpop.f32.mrf.mxu0
    %v231 = vadd.f32 %v102, %v230
    %v232 = vpop.f32.mrf.mxu0
    %v233 = vadd.f32 %v106, %v232
    %234 = vmatprep.mubr.bf16.mxu0 0
    %235 = vmatmul.mubr.bf16.gmra.mxu0 %v170
    %v236 = vpop.f32.mrf.mxu0
    %v237 = vadd.f32 %v102, %v236
    %v238 = vpop.f32.mrf.mxu0
    %v239 = vadd.f32 %v106, %v238
    %v240 = vpop.f32.mrf.mxu0
    %v241 = vadd.f32 %v102, %v240
    %v242 = vpop.f32.mrf.mxu0
    %v243 = vadd.f32 %v106, %v242
    %244 = vdwg.mxu0
    %245 = vmatprep.subr.bf16.mxu0 0
    %246 = vmatpush1.bf16.msra.mxu0 0
    %247 = vmatprep.subr.bf16.mxu0 0
    %248 = vmatpush1.bf16.msra.mxu0 0
    %249 = vmatprep.subr.bf16.mxu0 0
    %250 = vmatpush1.bf16.msra.mxu0 0
    %251 = vmatprep.subr.bf16.mxu0 0
    %252 = vmatpush1.bf16.msra.mxu0 0
    %253 = vmatprep.subr.bf16.mxu0 0
    %254 = vmatpush1.bf16.msra.mxu0 0
    %255 = vmatprep.subr.bf16.mxu0 0
    %256 = vmatpush1.bf16.msra.mxu0 0
    %257 = vmatprep.subr.bf16.mxu0 0
    %258 = vmatpush1.bf16.msra.mxu0 0
    %259 = vmatprep.subr.bf16.mxu0 %v154
    %260 = vmatpush1.bf16.msra.mxu0 %v153
    %261 = vmatprep.subr.bf16.mxu0 0
    %262 = vmatpush2.bf16.msra.mxu0 0
    %263 = vmatprep.subr.bf16.mxu0 0
    %264 = vmatpush2.bf16.msra.mxu0 0
    %265 = vmatprep.subr.bf16.mxu0 0
    %266 = vmatpush2.bf16.msra.mxu0 0
    %267 = vmatprep.subr.bf16.mxu0 0
    %268 = vmatpush2.bf16.msra.mxu0 0
    %269 = vmatprep.subr.bf16.mxu0 0
    %270 = vmatpush2.bf16.msra.mxu0 0
    %271 = vmatprep.subr.bf16.mxu0 0
    %272 = vmatpush2.bf16.msra.mxu0 0
    %273 = vmatprep.subr.bf16.mxu0 0
    %274 = vmatpush2.bf16.msra.mxu0 0
    %275 = vmatprep.subr.bf16.mxu0 0
    %276 = vmatpush2.bf16.msra.mxu0 0
    %277 = vmatprep.mubr.bf16.mxu0 0
    %278 = vmatmul.mubr.bf16.gmra.mxu0 %v161
    %v279 = vpop.f32.mrf.mxu0
    %v280 = vadd.f32 %v110, %v279
    %v281 = vpop.f32.mrf.mxu0
    %v282 = vadd.f32 %v114, %v281
    %v283 = vpop.f32.mrf.mxu0
    %v284 = vadd.f32 %v110, %v283
    %v285 = vpop.f32.mrf.mxu0
    %v286 = vadd.f32 %v114, %v285
    %287 = vmatprep.mubr.bf16.mxu0 0
    %288 = vmatmul.mubr.bf16.gmra.mxu0 %v164
    %v289 = vpop.f32.mrf.mxu0
    %v290 = vadd.f32 %v110, %v289
    %v291 = vpop.f32.mrf.mxu0
    %v292 = vadd.f32 %v114, %v291
    %v293 = vpop.f32.mrf.mxu0
    %v294 = vadd.f32 %v110, %v293
    %v295 = vpop.f32.mrf.mxu0
    %v296 = vadd.f32 %v114, %v295
    %297 = vmatprep.mubr.bf16.mxu0 0
    %298 = vmatmul.mubr.bf16.gmra.mxu0 %v167
    %v299 = vpop.f32.mrf.mxu0
    %v300 = vadd.f32 %v110, %v299
    %v301 = vpop.f32.mrf.mxu0
    %v302 = vadd.f32 %v114, %v301
    %v303 = vpop.f32.mrf.mxu0
    %v304 = vadd.f32 %v110, %v303
    %v305 = vpop.f32.mrf.mxu0
    %v306 = vadd.f32 %v114, %v305
    %307 = vmatprep.mubr.bf16.mxu0 0
    %308 = vmatmul.mubr.bf16.gmra.mxu0 %v170
    %v309 = vpop.f32.mrf.mxu0
    %v310 = vadd.f32 %v110, %v309
    %v311 = vpop.f32.mrf.mxu0
    %v312 = vadd.f32 %v114, %v311
    %v313 = vpop.f32.mrf.mxu0
    %v314 = vadd.f32 %v110, %v313
    %v315 = vpop.f32.mrf.mxu0
    %v316 = vadd.f32 %v114, %v315
    %317 = vdwg.mxu0
    %v350 = vrot.slane %v211, 7
    %vm351 = vcmask 1041409
    %v352 = vsel %vm351, %v350, %v207
    %v353 = vrot.slane %v217, 6
    %vm354 = vcmask 1042434
    %v355 = vsel %vm354, %v353, %v352
    %v356 = vrot.slane %v221, 5
    %vm357 = vcmask 1043459
    %v358 = vsel %vm357, %v356, %v355
    %v359 = vrot.slane %v227, 4
    %vm360 = vcmask 1044484
    %v361 = vsel %vm360, %v359, %v358
    %v362 = vrot.slane %v231, 3
    %vm363 = vcmask 1045509
    %v364 = vsel %vm363, %v362, %v361
    %v365 = vrot.slane %v237, 2
    %vm366 = vcmask 1046534
    %v367 = vsel %vm366, %v365, %v364
    %v368 = vrot.slane %v241, 1
    %vm369 = vcmask 1047559
    %v370 = vsel %vm369, %v368, %v367
    %v371 = vrot.slane %v213, 7
    %v372 = vsel %vm351, %v371, %v209
    %v373 = vrot.slane %v219, 6
    %v374 = vsel %vm354, %v373, %v372
    %v375 = vrot.slane %v223, 5
    %v376 = vsel %vm357, %v375, %v374
    %v377 = vrot.slane %v229, 4
    %v378 = vsel %vm360, %v377, %v376
    %v379 = vrot.slane %v233, 3
    %v380 = vsel %vm363, %v379, %v378
    %v381 = vrot.slane %v239, 2
    %v382 = vsel %vm366, %v381, %v380
    %v383 = vrot.slane %v243, 1
    %v384 = vsel %vm369, %v383, %v382
    %v385 = vrot.slane %v284, 7
    %v386 = vsel %vm351, %v385, %v280
    %v387 = vrot.slane %v290, 6
    %v388 = vsel %vm354, %v387, %v386
    %v389 = vrot.slane %v294, 5
    %v390 = vsel %vm357, %v389, %v388
    %v391 = vrot.slane %v300, 4
    %v392 = vsel %vm360, %v391, %v390
    %v393 = vrot.slane %v304, 3
    %v394 = vsel %vm363, %v393, %v392
    %v395 = vrot.slane %v310, 2
    %v396 = vsel %vm366, %v395, %v394
    %v397 = vrot.slane %v314, 1
    %v398 = vsel %vm369, %v397, %v396
    %v399 = vrot.slane %v286, 7
    %v400 = vsel %vm351, %v399, %v282
    %v401 = vrot.slane %v292, 6
    %v402 = vsel %vm354, %v401, %v400
    %v403 = vrot.slane %v296, 5
    %v404 = vsel %vm357, %v403, %v402
    %v405 = vrot.slane %v302, 4
    %v406 = vsel %vm360, %v405, %v404
    %v407 = vrot.slane %v306, 3
    %v408 = vsel %vm363, %v407, %v406
    %v409 = vrot.slane %v312, 2
    %v410 = vsel %vm366, %v409, %v408
    %v411 = vrot.slane %v316, 1
    %v412 = vsel %vm369, %v411, %v410
    %417 = vst [vmem:[#allocation2] sm:$0xff] %v370
    %418 = vst [vmem:[#allocation2 + $0x8] sm:$0xff] %v384
    %419 = vst [vmem:[#allocation2 + $0x10] sm:$0xff] %v398
    %420 = vst [vmem:[#allocation2 + $0x18] sm:$0xff] %v412
    %v421 = vrot.slane %v207, 1
    %v422 = vsel %vm351, %v211, %v421
    %v423 = vrot.slane %v217, 7
    %v424 = vsel %vm354, %v423, %v422
    %v425 = vrot.slane %v221, 6
    %v426 = vsel %vm357, %v425, %v424
    %v427 = vrot.slane %v227, 5
    %v428 = vsel %vm360, %v427, %v426
    %v429 = vrot.slane %v231, 4
    %v430 = vsel %vm363, %v429, %v428
    %v431 = vrot.slane %v237, 3
    %v432 = vsel %vm366, %v431, %v430
    %v433 = vrot.slane %v241, 2
    %v434 = vsel %vm369, %v433, %v432
    %v435 = vrot.slane %v209, 1
    %v436 = vsel %vm351, %v213, %v435
    %v437 = vrot.slane %v219, 7
    %v438 = vsel %vm354, %v437, %v436
    %v439 = vrot.slane %v223, 6
    %v440 = vsel %vm357, %v439, %v438
    %v441 = vrot.slane %v229, 5
    %v442 = vsel %vm360, %v441, %v440
    %v443 = vrot.slane %v233, 4
    %v444 = vsel %vm363, %v443, %v442
    %v445 = vrot.slane %v239, 3
    %v446 = vsel %vm366, %v445, %v444
    %v447 = vrot.slane %v243, 2
    %v448 = vsel %vm369, %v447, %v446
    %v449 = vrot.slane %v280, 1
    %v450 = vsel %vm351, %v284, %v449
    %v451 = vrot.slane %v290, 7
    %v452 = vsel %vm354, %v451, %v450
    %v453 = vrot.slane %v294, 6
    %v454 = vsel %vm357, %v453, %v452
    %v455 = vrot.slane %v300, 5
    %v456 = vsel %vm360, %v455, %v454
    %v457 = vrot.slane %v304, 4
    %v458 = vsel %vm363, %v457, %v456
    %v459 = vrot.slane %v310, 3
    %v460 = vsel %vm366, %v459, %v458
    %v461 = vrot.slane %v314, 2
    %v462 = vsel %vm369, %v461, %v460
    %v463 = vrot.slane %v282, 1
    %v464 = vsel %vm351, %v286, %v463
    %v465 = vrot.slane %v292, 7
    %v466 = vsel %vm354, %v465, %v464
    %v467 = vrot.slane %v296, 6
    %v468 = vsel %vm357, %v467, %v466
    %v469 = vrot.slane %v302, 5
    %v470 = vsel %vm360, %v469, %v468
    %v471 = vrot.slane %v306, 4
    %v472 = vsel %vm363, %v471, %v470
    %v473 = vrot.slane %v312, 3
    %v474 = vsel %vm366, %v473, %v472
    %v475 = vrot.slane %v316, 2
    %v476 = vsel %vm369, %v475, %v474
    %s481 = scalar_lea.vmem [#allocation2], 32
    %482 = vst [vmem:[%s481] sm:$0xff] %v434
    %483 = vst [vmem:[%s481 + $0x8] sm:$0xff] %v448
    %484 = vst [vmem:[%s481 + $0x10] sm:$0xff] %v462
    %485 = vst [vmem:[%s481 + $0x18] sm:$0xff] %v476
    %v486 = vrot.slane %v207, 2
    %v487 = vrot.slane %v211, 1
    %v488 = vsel %vm351, %v487, %v486
    %v489 = vsel %vm354, %v217, %v488
    %v490 = vrot.slane %v221, 7
    %v491 = vsel %vm357, %v490, %v489
    %v492 = vrot.slane %v227, 6
    %v493 = vsel %vm360, %v492, %v491
    %v494 = vrot.slane %v231, 5
    %v495 = vsel %vm363, %v494, %v493
    %v496 = vrot.slane %v237, 4
    %v497 = vsel %vm366, %v496, %v495
    %v498 = vrot.slane %v241, 3
    %v499 = vsel %vm369, %v498, %v497
    %v500 = vrot.slane %v209, 2
    %v501 = vrot.slane %v213, 1
    %v502 = vsel %vm351, %v501, %v500
    %v503 = vsel %vm354, %v219, %v502
    %v504 = vrot.slane %v223, 7
    %v505 = vsel %vm357, %v504, %v503
    %v506 = vrot.slane %v229, 6
    %v507 = vsel %vm360, %v506, %v505
    %v508 = vrot.slane %v233, 5
    %v509 = vsel %vm363, %v508, %v507
    %v510 = vrot.slane %v239, 4
    %v511 = vsel %vm366, %v510, %v509
    %v512 = vrot.slane %v243, 3
    %v513 = vsel %vm369, %v512, %v511
    %v514 = vrot.slane %v280, 2
    %v515 = vrot.slane %v284, 1
    %v516 = vsel %vm351, %v515, %v514
    %v517 = vsel %vm354, %v290, %v516
    %v518 = vrot.slane %v294, 7
    %v519 = vsel %vm357, %v518, %v517
    %v520 = vrot.slane %v300, 6
    %v521 = vsel %vm360, %v520, %v519
    %v522 = vrot.slane %v304, 5
    %v523 = vsel %vm363, %v522, %v521
    %v524 = vrot.slane %v310, 4
    %v525 = vsel %vm366, %v524, %v523
    %v526 = vrot.slane %v314, 3
    %v527 = vsel %vm369, %v526, %v525
    %v528 = vrot.slane %v282, 2
    %v529 = vrot.slane %v286, 1
    %v530 = vsel %vm351, %v529, %v528
    %v531 = vsel %vm354, %v292, %v530
    %v532 = vrot.slane %v296, 7
    %v533 = vsel %vm357, %v532, %v531
    %v534 = vrot.slane %v302, 6
    %v535 = vsel %vm360, %v534, %v533
    %v536 = vrot.slane %v306, 5
    %v537 = vsel %vm363, %v536, %v535
    %v538 = vrot.slane %v312, 4
    %v539 = vsel %vm366, %v538, %v537
    %v540 = vrot.slane %v316, 3
    %v541 = vsel %vm369, %v540, %v539
    %s546 = scalar_lea.vmem [#allocation2], 64
    %547 = vst [vmem:[%s546] sm:$0xff] %v499
    %548 = vst [vmem:[%s546 + $0x8] sm:$0xff] %v513
    %549 = vst [vmem:[%s546 + $0x10] sm:$0xff] %v527
    %550 = vst [vmem:[%s546 + $0x18] sm:$0xff] %v541
    %v551 = vrot.slane %v207, 3
    %v552 = vrot.slane %v211, 2
    %v553 = vsel %vm351, %v552, %v551
    %v554 = vrot.slane %v217, 1
    %v555 = vsel %vm354, %v554, %v553
    %v556 = vsel %vm357, %v221, %v555
    %v557 = vrot.slane %v227, 7
    %v558 = vsel %vm360, %v557, %v556
    %v559 = vrot.slane %v231, 6
    %v560 = vsel %vm363, %v559, %v558
    %v561 = vrot.slane %v237, 5
    %v562 = vsel %vm366, %v561, %v560
    %v563 = vrot.slane %v241, 4
    %v564 = vsel %vm369, %v563, %v562
    %v565 = vrot.slane %v209, 3
    %v566 = vrot.slane %v213, 2
    %v567 = vsel %vm351, %v566, %v565
    %v568 = vrot.slane %v219, 1
    %v569 = vsel %vm354, %v568, %v567
    %v570 = vsel %vm357, %v223, %v569
    %v571 = vrot.slane %v229, 7
    %v572 = vsel %vm360, %v571, %v570
    %v573 = vrot.slane %v233, 6
    %v574 = vsel %vm363, %v573, %v572
    %v575 = vrot.slane %v239, 5
    %v576 = vsel %vm366, %v575, %v574
    %v577 = vrot.slane %v243, 4
    %v578 = vsel %vm369, %v577, %v576
    %v579 = vrot.slane %v280, 3
    %v580 = vrot.slane %v284, 2
    %v581 = vsel %vm351, %v580, %v579
    %v582 = vrot.slane %v290, 1
    %v583 = vsel %vm354, %v582, %v581
    %v584 = vsel %vm357, %v294, %v583
    %v585 = vrot.slane %v300, 7
    %v586 = vsel %vm360, %v585, %v584
    %v587 = vrot.slane %v304, 6
    %v588 = vsel %vm363, %v587, %v586
    %v589 = vrot.slane %v310, 5
    %v590 = vsel %vm366, %v589, %v588
    %v591 = vrot.slane %v314, 4
    %v592 = vsel %vm369, %v591, %v590
    %v593 = vrot.slane %v282, 3
    %v594 = vrot.slane %v286, 2
    %v595 = vsel %vm351, %v594, %v593
    %v596 = vrot.slane %v292, 1
    %v597 = vsel %vm354, %v596, %v595
    %v598 = vsel %vm357, %v296, %v597
    %v599 = vrot.slane %v302, 7
    %v600 = vsel %vm360, %v599, %v598
    %v601 = vrot.slane %v306, 6
    %v602 = vsel %vm363, %v601, %v600
    %v603 = vrot.slane %v312, 5
    %v604 = vsel %vm366, %v603, %v602
    %v605 = vrot.slane %v316, 4
    %v606 = vsel %vm369, %v605, %v604
    %s611 = scalar_lea.vmem [#allocation2], 96
    %612 = vst [vmem:[%s611] sm:$0xff] %v564
    %613 = vst [vmem:[%s611 + $0x8] sm:$0xff] %v578
    %614 = vst [vmem:[%s611 + $0x10] sm:$0xff] %v592
    %615 = vst [vmem:[%s611 + $0x18] sm:$0xff] %v606
    %v616 = vrot.slane %v207, 4
    %v617 = vrot.slane %v211, 3
    %v618 = vsel %vm351, %v617, %v616
    %v619 = vrot.slane %v217, 2
    %v620 = vsel %vm354, %v619, %v618
    %v621 = vrot.slane %v221, 1
    %v622 = vsel %vm357, %v621, %v620
    %v623 = vsel %vm360, %v227, %v622
    %v624 = vrot.slane %v231, 7
    %v625 = vsel %vm363, %v624, %v623
    %v626 = vrot.slane %v237, 6
    %v627 = vsel %vm366, %v626, %v625
    %v628 = vrot.slane %v241, 5
    %v629 = vsel %vm369, %v628, %v627
    %v630 = vrot.slane %v209, 4
    %v631 = vrot.slane %v213, 3
    %v632 = vsel %vm351, %v631, %v630
    %v633 = vrot.slane %v219, 2
    %v634 = vsel %vm354, %v633, %v632
    %v635 = vrot.slane %v223, 1
    %v636 = vsel %vm357, %v635, %v634
    %v637 = vsel %vm360, %v229, %v636
    %v638 = vrot.slane %v233, 7
    %v639 = vsel %vm363, %v638, %v637
    %v640 = vrot.slane %v239, 6
    %v641 = vsel %vm366, %v640, %v639
    %v642 = vrot.slane %v243, 5
    %v643 = vsel %vm369, %v642, %v641
    %v644 = vrot.slane %v280, 4
    %v645 = vrot.slane %v284, 3
    %v646 = vsel %vm351, %v645, %v644
    %v647 = vrot.slane %v290, 2
    %v648 = vsel %vm354, %v647, %v646
    %v649 = vrot.slane %v294, 1
    %v650 = vsel %vm357, %v649, %v648
    %v651 = vsel %vm360, %v300, %v650
    %v652 = vrot.slane %v304, 7
    %v653 = vsel %vm363, %v652, %v651
    %v654 = vrot.slane %v310, 6
    %v655 = vsel %vm366, %v654, %v653
    %v656 = vrot.slane %v314, 5
    %v657 = vsel %vm369, %v656, %v655
    %v658 = vrot.slane %v282, 4
    %v659 = vrot.slane %v286, 3
    %v660 = vsel %vm351, %v659, %v658
    %v661 = vrot.slane %v292, 2
    %v662 = vsel %vm354, %v661, %v660
    %v663 = vrot.slane %v296, 1
    %v664 = vsel %vm357, %v663, %v662
    %v665 = vsel %vm360, %v302, %v664
    %v666 = vrot.slane %v306, 7
    %v667 = vsel %vm363, %v666, %v665
    %v668 = vrot.slane %v312, 6
    %v669 = vsel %vm366, %v668, %v667
    %v670 = vrot.slane %v316, 5
    %v671 = vsel %vm369, %v670, %v669
    %s676 = scalar_lea.vmem [#allocation2], 128
    %677 = vst [vmem:[%s676] sm:$0xff] %v629
    %678 = vst [vmem:[%s676 + $0x8] sm:$0xff] %v643
    %679 = vst [vmem:[%s676 + $0x10] sm:$0xff] %v657
    %680 = vst [vmem:[%s676 + $0x18] sm:$0xff] %v671
    %v681 = vrot.slane %v207, 5
    %v682 = vrot.slane %v211, 4
    %v683 = vsel %vm351, %v682, %v681
    %v684 = vrot.slane %v217, 3
    %v685 = vsel %vm354, %v684, %v683
    %v686 = vrot.slane %v221, 2
    %v687 = vsel %vm357, %v686, %v685
    %v688 = vrot.slane %v227, 1
    %v689 = vsel %vm360, %v688, %v687
    %v690 = vsel %vm363, %v231, %v689
    %v691 = vrot.slane %v237, 7
    %v692 = vsel %vm366, %v691, %v690
    %v693 = vrot.slane %v241, 6
    %v694 = vsel %vm369, %v693, %v692
    %v695 = vrot.slane %v209, 5
    %v696 = vrot.slane %v213, 4
    %v697 = vsel %vm351, %v696, %v695
    %v698 = vrot.slane %v219, 3
    %v699 = vsel %vm354, %v698, %v697
    %v700 = vrot.slane %v223, 2
    %v701 = vsel %vm357, %v700, %v699
    %v702 = vrot.slane %v229, 1
    %v703 = vsel %vm360, %v702, %v701
    %v704 = vsel %vm363, %v233, %v703
    %v705 = vrot.slane %v239, 7
    %v706 = vsel %vm366, %v705, %v704
    %v707 = vrot.slane %v243, 6
    %v708 = vsel %vm369, %v707, %v706
    %v709 = vrot.slane %v280, 5
    %v710 = vrot.slane %v284, 4
    %v711 = vsel %vm351, %v710, %v709
    %v712 = vrot.slane %v290, 3
    %v713 = vsel %vm354, %v712, %v711
    %v714 = vrot.slane %v294, 2
    %v715 = vsel %vm357, %v714, %v713
    %v716 = vrot.slane %v300, 1
    %v717 = vsel %vm360, %v716, %v715
    %v718 = vsel %vm363, %v304, %v717
    %v719 = vrot.slane %v310, 7
    %v720 = vsel %vm366, %v719, %v718
    %v721 = vrot.slane %v314, 6
    %v722 = vsel %vm369, %v721, %v720
    %v723 = vrot.slane %v282, 5
    %v724 = vrot.slane %v286, 4
    %v725 = vsel %vm351, %v724, %v723
    %v726 = vrot.slane %v292, 3
    %v727 = vsel %vm354, %v726, %v725
    %v728 = vrot.slane %v296, 2
    %v729 = vsel %vm357, %v728, %v727
    %v730 = vrot.slane %v302, 1
    %v731 = vsel %vm360, %v730, %v729
    %v732 = vsel %vm363, %v306, %v731
    %v733 = vrot.slane %v312, 7
    %v734 = vsel %vm366, %v733, %v732
    %v735 = vrot.slane %v316, 6
    %v736 = vsel %vm369, %v735, %v734
    %s741 = scalar_lea.vmem [#allocation2], 160
    %742 = vst [vmem:[%s741] sm:$0xff] %v694
    %743 = vst [vmem:[%s741 + $0x8] sm:$0xff] %v708
    %744 = vst [vmem:[%s741 + $0x10] sm:$0xff] %v722
    %745 = vst [vmem:[%s741 + $0x18] sm:$0xff] %v736
    %v746 = vrot.slane %v207, 6
    %v747 = vrot.slane %v211, 5
    %v748 = vsel %vm351, %v747, %v746
    %v749 = vrot.slane %v217, 4
    %v750 = vsel %vm354, %v749, %v748
    %v751 = vrot.slane %v221, 3
    %v752 = vsel %vm357, %v751, %v750
    %v753 = vrot.slane %v227, 2
    %v754 = vsel %vm360, %v753, %v752
    %v755 = vrot.slane %v231, 1
    %v756 = vsel %vm363, %v755, %v754
    %v757 = vsel %vm366, %v237, %v756
    %v758 = vrot.slane %v241, 7
    %v759 = vsel %vm369, %v758, %v757
    %v760 = vrot.slane %v209, 6
    %v761 = vrot.slane %v213, 5
    %v762 = vsel %vm351, %v761, %v760
    %v763 = vrot.slane %v219, 4
    %v764 = vsel %vm354, %v763, %v762
    %v765 = vrot.slane %v223, 3
    %v766 = vsel %vm357, %v765, %v764
    %v767 = vrot.slane %v229, 2
    %v768 = vsel %vm360, %v767, %v766
    %v769 = vrot.slane %v233, 1
    %v770 = vsel %vm363, %v769, %v768
    %v771 = vsel %vm366, %v239, %v770
    %v772 = vrot.slane %v243, 7
    %v773 = vsel %vm369, %v772, %v771
    %v774 = vrot.slane %v280, 6
    %v775 = vrot.slane %v284, 5
    %v776 = vsel %vm351, %v775, %v774
    %v777 = vrot.slane %v290, 4
    %v778 = vsel %vm354, %v777, %v776
    %v779 = vrot.slane %v294, 3
    %v780 = vsel %vm357, %v779, %v778
    %v781 = vrot.slane %v300, 2
    %v782 = vsel %vm360, %v781, %v780
    %v783 = vrot.slane %v304, 1
    %v784 = vsel %vm363, %v783, %v782
    %v785 = vsel %vm366, %v310, %v784
    %v786 = vrot.slane %v314, 7
    %v787 = vsel %vm369, %v786, %v785
    %v788 = vrot.slane %v282, 6
    %v789 = vrot.slane %v286, 5
    %v790 = vsel %vm351, %v789, %v788
    %v791 = vrot.slane %v292, 4
    %v792 = vsel %vm354, %v791, %v790
    %v793 = vrot.slane %v296, 3
    %v794 = vsel %vm357, %v793, %v792
    %v795 = vrot.slane %v302, 2
    %v796 = vsel %vm360, %v795, %v794
    %v797 = vrot.slane %v306, 1
    %v798 = vsel %vm363, %v797, %v796
    %v799 = vsel %vm366, %v312, %v798
    %v800 = vrot.slane %v316, 7
    %v801 = vsel %vm369, %v800, %v799
    %s806 = scalar_lea.vmem [#allocation2], 192
    %807 = vst [vmem:[%s806] sm:$0xff] %v759
    %808 = vst [vmem:[%s806 + $0x8] sm:$0xff] %v773
    %809 = vst [vmem:[%s806 + $0x10] sm:$0xff] %v787
    %810 = vst [vmem:[%s806 + $0x18] sm:$0xff] %v801
    %v811 = vrot.slane %v207, 7
    %v812 = vrot.slane %v211, 6
    %v813 = vsel %vm351, %v812, %v811
    %v814 = vrot.slane %v217, 5
    %v815 = vsel %vm354, %v814, %v813
    %v816 = vrot.slane %v221, 4
    %v817 = vsel %vm357, %v816, %v815
    %v818 = vrot.slane %v227, 3
    %v819 = vsel %vm360, %v818, %v817
    %v820 = vrot.slane %v231, 2
    %v821 = vsel %vm363, %v820, %v819
    %v822 = vrot.slane %v237, 1
    %v823 = vsel %vm366, %v822, %v821
    %v824 = vsel %vm369, %v241, %v823
    %v825 = vrot.slane %v209, 7
    %v826 = vrot.slane %v213, 6
    %v827 = vsel %vm351, %v826, %v825
    %v828 = vrot.slane %v219, 5
    %v829 = vsel %vm354, %v828, %v827
    %v830 = vrot.slane %v223, 4
    %v831 = vsel %vm357, %v830, %v829
    %v832 = vrot.slane %v229, 3
    %v833 = vsel %vm360, %v832, %v831
    %v834 = vrot.slane %v233, 2
    %v835 = vsel %vm363, %v834, %v833
    %v836 = vrot.slane %v239, 1
    %v837 = vsel %vm366, %v836, %v835
    %v838 = vsel %vm369, %v243, %v837
    %v839 = vrot.slane %v280, 7
    %v840 = vrot.slane %v284, 6
    %v841 = vsel %vm351, %v840, %v839
    %v842 = vrot.slane %v290, 5
    %v843 = vsel %vm354, %v842, %v841
    %v844 = vrot.slane %v294, 4
    %v845 = vsel %vm357, %v844, %v843
    %v846 = vrot.slane %v300, 3
    %v847 = vsel %vm360, %v846, %v845
    %v848 = vrot.slane %v304, 2
    %v849 = vsel %vm363, %v848, %v847
    %v850 = vrot.slane %v310, 1
    %v851 = vsel %vm366, %v850, %v849
    %v852 = vsel %vm369, %v314, %v851
    %v853 = vrot.slane %v282, 7
    %v854 = vrot.slane %v286, 6
    %v855 = vsel %vm351, %v854, %v853
    %v856 = vrot.slane %v292, 5
    %v857 = vsel %vm354, %v856, %v855
    %v858 = vrot.slane %v296, 4
    %v859 = vsel %vm357, %v858, %v857
    %v860 = vrot.slane %v302, 3
    %v861 = vsel %vm360, %v860, %v859
    %v862 = vrot.slane %v306, 2
    %v863 = vsel %vm363, %v862, %v861
    %v864 = vrot.slane %v312, 1
    %v865 = vsel %vm366, %v864, %v863
    %v866 = vsel %vm369, %v316, %v865
    %s871 = scalar_lea.vmem [#allocation2], 224
    %872 = vst [vmem:[%s871] sm:$0xff] %v824
    %873 = vst [vmem:[%s871 + $0x8] sm:$0xff] %v838
    %874 = vst [vmem:[%s871 + $0x10] sm:$0xff] %v852
    %875 = vst [vmem:[%s871 + $0x18] sm:$0xff] %v866
    %v876 = vld [vmem:[%s1] sm:$0xff]
    %877 = vset.pattern.permute.xlu0 0
    %878 = vperm.xlu0 %877, %v876
    %v879 = vpop.permute.xlu0 %878
    %s880 = smul.u32 0, 8
    %v881 = vld [vmem:[#allocation3] sm:$0xff]
    %v882 = vld [vmem:[#allocation4] sm:$0xff]
    %v883 = vld [vmem:[#allocation2] sm:$0xff]
    %v884 = vld [vmem:[#allocation2 + $0x8] sm:$0xff]
    %v885 = vld [vmem:[#allocation2 + $0x10] sm:$0xff]
    %v886 = vld [vmem:[#allocation2 + $0x18] sm:$0xff]
    %v887 = vpack.c.bf16 %v881, %v881
    %v920 = vunpack.c.l.b16 %v57
    %v921 = vunpack.c.h.b16 %v57
    %v922 = vunpack.c.l.b16 %v58
    %v923 = vunpack.c.h.b16 %v58
    %v924 = vunpack.c.l.b16 %v59
    %v925 = vunpack.c.h.b16 %v59
    %v926 = vunpack.c.l.b16 %v60
    %v927 = vunpack.c.h.b16 %v60
    %v928 = vunpack.c.l.b16 %v61
    %v929 = vunpack.c.h.b16 %v61
    %v930 = vunpack.c.l.b16 %v62
    %v931 = vunpack.c.h.b16 %v62
    %v932 = vunpack.c.l.b16 %v63
    %v933 = vunpack.c.h.b16 %v63
    %v934 = vunpack.c.l.b16 %v64
    %v935 = vunpack.c.h.b16 %v64
    %v936 = vunpack.c.l.b16 %v65
    %v937 = vunpack.c.h.b16 %v65
    %v938 = vunpack.c.l.b16 %v66
    %v939 = vunpack.c.h.b16 %v66
    %v940 = vunpack.c.l.b16 %v67
    %v941 = vunpack.c.h.b16 %v67
    %v942 = vunpack.c.l.b16 %v68
    %v943 = vunpack.c.h.b16 %v68
    %v944 = vunpack.c.l.b16 %v69
    %v945 = vunpack.c.h.b16 %v69
    %v946 = vunpack.c.l.b16 %v70
    %v947 = vunpack.c.h.b16 %v70
    %v948 = vunpack.c.l.b16 %v71
    %v949 = vunpack.c.h.b16 %v71
    %v950 = vunpack.c.l.b16 %v72
    %v951 = vunpack.c.h.b16 %v72
    %v952 = vunpack.c.l.b16 %v73
    %v953 = vunpack.c.h.b16 %v73
    %v954 = vunpack.c.l.b16 %v74
    %v955 = vunpack.c.h.b16 %v74
    %v956 = vunpack.c.l.b16 %v75
    %v957 = vunpack.c.h.b16 %v75
    %v958 = vunpack.c.l.b16 %v76
    %v959 = vunpack.c.h.b16 %v76
    %v960 = vunpack.c.l.b16 %v77
    %v961 = vunpack.c.h.b16 %v77
    %v962 = vunpack.c.l.b16 %v78
    %v963 = vunpack.c.h.b16 %v78
    %v964 = vunpack.c.l.b16 %v79
    %v965 = vunpack.c.h.b16 %v79
    %v966 = vunpack.c.l.b16 %v80
    %v967 = vunpack.c.h.b16 %v80
    %v968 = vunpack.c.l.b16 %v81
    %v969 = vunpack.c.h.b16 %v81
    %v970 = vunpack.c.l.b16 %v82
    %v971 = vunpack.c.h.b16 %v82
    %v972 = vunpack.c.l.b16 %v83
    %v973 = vunpack.c.h.b16 %v83
    %v974 = vunpack.c.l.b16 %v84
    %v975 = vunpack.c.h.b16 %v84
    %v976 = vunpack.c.l.b16 %v85
    %v977 = vunpack.c.h.b16 %v85
    %v978 = vunpack.c.l.b16 %v86
    %v979 = vunpack.c.h.b16 %v86
    %v980 = vunpack.c.l.b16 %v87
    %v981 = vunpack.c.h.b16 %v87
    %v982 = vunpack.c.l.b16 %v88
    %v983 = vunpack.c.h.b16 %v88
    %v984 = vpack.c.b16 %v924, %v920
    %v985 = vpack.c.b16 %v925, %v921
    %v986 = vpack.c.b16 %v926, %v922
    %v987 = vpack.c.b16 %v927, %v923
    %v988 = vpack.c.b16 %v932, %v928
    %v989 = vpack.c.b16 %v933, %v929
    %v990 = vpack.c.b16 %v934, %v930
    %v991 = vpack.c.b16 %v935, %v931
    %v992 = vpack.c.b16 %v940, %v936
    %v993 = vpack.c.b16 %v941, %v937
    %v994 = vpack.c.b16 %v942, %v938
    %v995 = vpack.c.b16 %v943, %v939
    %v996 = vpack.c.b16 %v948, %v944
    %v997 = vpack.c.b16 %v949, %v945
    %v998 = vpack.c.b16 %v950, %v946
    %v999 = vpack.c.b16 %v951, %v947
    %v1000 = vpack.c.b16 %v956, %v952
    %v1001 = vpack.c.b16 %v957, %v953
    %v1002 = vpack.c.b16 %v958, %v954
    %v1003 = vpack.c.b16 %v959, %v955
    %v1004 = vpack.c.b16 %v964, %v960
    %v1005 = vpack.c.b16 %v965, %v961
    %v1006 = vpack.c.b16 %v966, %v962
    %v1007 = vpack.c.b16 %v967, %v963
    %v1008 = vpack.c.b16 %v972, %v968
    %v1009 = vpack.c.b16 %v973, %v969
    %v1010 = vpack.c.b16 %v974, %v970
    %v1011 = vpack.c.b16 %v975, %v971
    %v1012 = vpack.c.b16 %v980, %v976
    %v1013 = vpack.c.b16 %v981, %v977
    %v1014 = vpack.c.b16 %v982, %v978
    %v1015 = vpack.c.b16 %v983, %v979
    %1048 = vmatprep.subr.bf16.mxu0 %v1013
    %1049 = vmatpush1.bf16.msra.mxu0 %v1012
    %1050 = vmatprep.subr.bf16.mxu0 %v1009
    %1051 = vmatpush1.bf16.msra.mxu0 %v1008
    %1052 = vmatprep.subr.bf16.mxu0 %v1005
    %1053 = vmatpush1.bf16.msra.mxu0 %v1004
    %1054 = vmatprep.subr.bf16.mxu0 %v1001
    %1055 = vmatpush1.bf16.msra.mxu0 %v1000
    %1056 = vmatprep.subr.bf16.mxu0 %v997
    %1057 = vmatpush1.bf16.msra.mxu0 %v996
    %1058 = vmatprep.subr.bf16.mxu0 %v993
    %1059 = vmatpush1.bf16.msra.mxu0 %v992
    %1060 = vmatprep.subr.bf16.mxu0 %v989
    %1061 = vmatpush1.bf16.msra.mxu0 %v988
    %1062 = vmatprep.subr.bf16.mxu0 %v985
    %1063 = vmatpush1.bf16.msra.mxu0 %v984
    %1064 = vmatprep.subr.bf16.mxu0 0
    %1065 = vmatpush2.bf16.msra.mxu0 0
    %1066 = vmatprep.subr.bf16.mxu0 0
    %1067 = vmatpush2.bf16.msra.mxu0 0
    %1068 = vmatprep.subr.bf16.mxu0 0
    %1069 = vmatpush2.bf16.msra.mxu0 0
    %1070 = vmatprep.subr.bf16.mxu0 0
    %1071 = vmatpush2.bf16.msra.mxu0 0
    %1072 = vmatprep.subr.bf16.mxu0 0
    %1073 = vmatpush2.bf16.msra.mxu0 0
    %1074 = vmatprep.subr.bf16.mxu0 0
    %1075 = vmatpush2.bf16.msra.mxu0 0
    %1076 = vmatprep.subr.bf16.mxu0 0
    %1077 = vmatpush2.bf16.msra.mxu0 0
    %1078 = vmatprep.subr.bf16.mxu0 0
    %1079 = vmatpush2.bf16.msra.mxu0 0
    %1080 = vmatprep.mubr.bf16.mxu0 0
    %1081 = vmatmul.mubr.bf16.gmra.mxu0 %v887
    %v1082 = vpop.f32.mrf.mxu0
    %v1083 = vadd.f32 0.0, %v1082
    %v1084 = vpop.f32.mrf.mxu0
    %v1085 = vadd.f32 0.0, %v1084
    %v1086 = vpop.f32.mrf.mxu0
    %v1087 = vpop.f32.mrf.mxu0
    %1088 = vdwg.mxu0
    %1089 = vmatprep.subr.bf16.mxu0 %v1015
    %1090 = vmatpush1.bf16.msra.mxu0 %v1014
    %1091 = vmatprep.subr.bf16.mxu0 %v1011
    %1092 = vmatpush1.bf16.msra.mxu0 %v1010
    %1093 = vmatprep.subr.bf16.mxu0 %v1007
    %1094 = vmatpush1.bf16.msra.mxu0 %v1006
    %1095 = vmatprep.subr.bf16.mxu0 %v1003
    %1096 = vmatpush1.bf16.msra.mxu0 %v1002
    %1097 = vmatprep.subr.bf16.mxu0 %v999
    %1098 = vmatpush1.bf16.msra.mxu0 %v998
    %1099 = vmatprep.subr.bf16.mxu0 %v995
    %1100 = vmatpush1.bf16.msra.mxu0 %v994
    %1101 = vmatprep.subr.bf16.mxu0 %v991
    %1102 = vmatpush1.bf16.msra.mxu0 %v990
    %1103 = vmatprep.subr.bf16.mxu0 %v987
    %1104 = vmatpush1.bf16.msra.mxu0 %v986
    %1105 = vmatprep.subr.bf16.mxu0 0
    %1106 = vmatpush2.bf16.msra.mxu0 0
    %1107 = vmatprep.subr.bf16.mxu0 0
    %1108 = vmatpush2.bf16.msra.mxu0 0
    %1109 = vmatprep.subr.bf16.mxu0 0
    %1110 = vmatpush2.bf16.msra.mxu0 0
    %1111 = vmatprep.subr.bf16.mxu0 0
    %1112 = vmatpush2.bf16.msra.mxu0 0
    %1113 = vmatprep.subr.bf16.mxu0 0
    %1114 = vmatpush2.bf16.msra.mxu0 0
    %1115 = vmatprep.subr.bf16.mxu0 0
    %1116 = vmatpush2.bf16.msra.mxu0 0
    %1117 = vmatprep.subr.bf16.mxu0 0
    %1118 = vmatpush2.bf16.msra.mxu0 0
    %1119 = vmatprep.subr.bf16.mxu0 0
    %1120 = vmatpush2.bf16.msra.mxu0 0
    %1121 = vmatprep.mubr.bf16.mxu0 0
    %1122 = vmatmul.mubr.bf16.gmra.mxu0 %v887
    %v1123 = vpop.f32.mrf.mxu0
    %v1124 = vadd.f32 0.0, %v1123
    %v1125 = vpop.f32.mrf.mxu0
    %v1126 = vadd.f32 0.0, %v1125
    %v1127 = vpop.f32.mrf.mxu0
    %v1128 = vpop.f32.mrf.mxu0
    %1129 = vdwg.mxu0
    %v1130 = vadd.f32 %v883, %v1083
    %v1131 = vadd.f32 %v884, %v1085
    %v1132 = vadd.f32 %v885, %v1124
    %v1133 = vadd.f32 %v886, %v1126
    %v1134 = vxor.u32 %v1130, 2147483648
    %v1135 = vxor.u32 %v1131, 2147483648
    %v1136 = vxor.u32 %v1132, 2147483648
    %v1137 = vmul.f32 %v1134, 1.442695
    %v1138 = vpow.pop %v1137
    %v1139 = vmul.f32 %v1135, 1.442695
    %v1140 = vpow.pop %v1139
    %v1141 = vmul.f32 %v1136, 1.442695
    %v1142 = vpow.pop %v1141
    %v1143 = vadd.f32 %v1138, 1.0
    %v1144 = vadd.f32 %v1140, 1.0
    %v1145 = vadd.f32 %v1142, 1.0
    %v1146 = vrcp.pop %v1143
    %v1147 = vmul.f32 1.0, %v1146
    %v1148 = vrcp.pop %v1144
    %v1149 = vmul.f32 1.0, %v1148
    %v1150 = vrcp.pop %v1145
    %v1151 = vmul.f32 1.0, %v1150
    %v1152 = vtanh.pop %v1133
    %v1153 = vmul.f32 %v1149, %v882
    %v1154 = vmul.f32 %v1147, %v1152
    %v1155 = vadd.f32 %v1153, %v1154
    %v1156 = vtanh.pop %v1155
    %v1157 = vmul.f32 %v1151, %v1156
    %v1158 = vstv %s880
    %vm1159 = vcmp.lt.s32.totalorder %v1158, %v879
    %v1160 = vsel %vm1159, %v1157, %v881
    %v1161 = vsel %vm1159, %v1155, %v882
    %v1162 = vld [vmem:[%s481] sm:$0xff]
    %v1163 = vld [vmem:[%s481 + $0x8] sm:$0xff]
    %v1164 = vld [vmem:[%s481 + $0x10] sm:$0xff]
    %v1165 = vld [vmem:[%s481 + $0x18] sm:$0xff]
    %v1166 = vpack.c.bf16 %v1160, %v1160
    %1167 = vmatprep.subr.bf16.mxu0 %v1013
    %1168 = vmatpush1.bf16.msra.mxu0 %v1012
    %1169 = vmatprep.subr.bf16.mxu0 %v1009
    %1170 = vmatpush1.bf16.msra.mxu0 %v1008
    %1171 = vmatprep.subr.bf16.mxu0 %v1005
    %1172 = vmatpush1.bf16.msra.mxu0 %v1004
    %1173 = vmatprep.subr.bf16.mxu0 %v1001
    %1174 = vmatpush1.bf16.msra.mxu0 %v1000
    %1175 = vmatprep.subr.bf16.mxu0 %v997
    %1176 = vmatpush1.bf16.msra.mxu0 %v996
    %1177 = vmatprep.subr.bf16.mxu0 %v993
    %1178 = vmatpush1.bf16.msra.mxu0 %v992
    %1179 = vmatprep.subr.bf16.mxu0 %v989
    %1180 = vmatpush1.bf16.msra.mxu0 %v988
    %1181 = vmatprep.subr.bf16.mxu0 %v985
    %1182 = vmatpush1.bf16.msra.mxu0 %v984
    %1183 = vmatprep.subr.bf16.mxu0 0
    %1184 = vmatpush2.bf16.msra.mxu0 0
    %1185 = vmatprep.subr.bf16.mxu0 0
    %1186 = vmatpush2.bf16.msra.mxu0 0
    %1187 = vmatprep.subr.bf16.mxu0 0
    %1188 = vmatpush2.bf16.msra.mxu0 0
    %1189 = vmatprep.subr.bf16.mxu0 0
    %1190 = vmatpush2.bf16.msra.mxu0 0
    %1191 = vmatprep.subr.bf16.mxu0 0
    %1192 = vmatpush2.bf16.msra.mxu0 0
    %1193 = vmatprep.subr.bf16.mxu0 0
    %1194 = vmatpush2.bf16.msra.mxu0 0
    %1195 = vmatprep.subr.bf16.mxu0 0
    %1196 = vmatpush2.bf16.msra.mxu0 0
    %1197 = vmatprep.subr.bf16.mxu0 0
    %1198 = vmatpush2.bf16.msra.mxu0 0
    %1199 = vmatprep.mubr.bf16.mxu0 0
    %1200 = vmatmul.mubr.bf16.gmra.mxu0 %v1166
    %v1201 = vpop.f32.mrf.mxu0
    %v1202 = vadd.f32 0.0, %v1201
    %v1203 = vpop.f32.mrf.mxu0
    %v1204 = vadd.f32 0.0, %v1203
    %v1205 = vpop.f32.mrf.mxu0
    %v1206 = vpop.f32.mrf.mxu0
    %1207 = vdwg.mxu0
    %1208 = vmatprep.subr.bf16.mxu0 %v1015
    %1209 = vmatpush1.bf16.msra.mxu0 %v1014
    %1210 = vmatprep.subr.bf16.mxu0 %v1011
    %1211 = vmatpush1.bf16.msra.mxu0 %v1010
    %1212 = vmatprep.subr.bf16.mxu0 %v1007
    %1213 = vmatpush1.bf16.msra.mxu0 %v1006
    %1214 = vmatprep.subr.bf16.mxu0 %v1003
    %1215 = vmatpush1.bf16.msra.mxu0 %v1002
    %1216 = vmatprep.subr.bf16.mxu0 %v999
    %1217 = vmatpush1.bf16.msra.mxu0 %v998
    %1218 = vmatprep.subr.bf16.mxu0 %v995
    %1219 = vmatpush1.bf16.msra.mxu0 %v994
    %1220 = vmatprep.subr.bf16.mxu0 %v991
    %1221 = vmatpush1.bf16.msra.mxu0 %v990
    %1222 = vmatprep.subr.bf16.mxu0 %v987
    %1223 = vmatpush1.bf16.msra.mxu0 %v986
    %1224 = vmatprep.subr.bf16.mxu0 0
    %1225 = vmatpush2.bf16.msra.mxu0 0
    %1226 = vmatprep.subr.bf16.mxu0 0
    %1227 = vmatpush2.bf16.msra.mxu0 0
    %1228 = vmatprep.subr.bf16.mxu0 0
    %1229 = vmatpush2.bf16.msra.mxu0 0
    %1230 = vmatprep.subr.bf16.mxu0 0
    %1231 = vmatpush2.bf16.msra.mxu0 0
    %1232 = vmatprep.subr.bf16.mxu0 0
    %1233 = vmatpush2.bf16.msra.mxu0 0
    %1234 = vmatprep.subr.bf16.mxu0 0
    %1235 = vmatpush2.bf16.msra.mxu0 0
    %1236 = vmatprep.subr.bf16.mxu0 0
    %1237 = vmatpush2.bf16.msra.mxu0 0
    %1238 = vmatprep.subr.bf16.mxu0 0
    %1239 = vmatpush2.bf16.msra.mxu0 0
    %1240 = vmatprep.mubr.bf16.mxu0 0
    %1241 = vmatmul.mubr.bf16.gmra.mxu0 %v1166
    %v1242 = vpop.f32.mrf.mxu0
    %v1243 = vadd.f32 0.0, %v1242
    %v1244 = vpop.f32.mrf.mxu0
    %v1245 = vadd.f32 0.0, %v1244
    %v1246 = vpop.f32.mrf.mxu0
    %v1247 = vpop.f32.mrf.mxu0
    %1248 = vdwg.mxu0
    %v1249 = vadd.f32 %v1162, %v1202
    %v1250 = vadd.f32 %v1163, %v1204
    %v1251 = vadd.f32 %v1164, %v1243
    %v1252 = vadd.f32 %v1165, %v1245
    %v1253 = vxor.u32 %v1249, 2147483648
    %v1254 = vxor.u32 %v1250, 2147483648
    %v1255 = vxor.u32 %v1251, 2147483648
    %v1256 = vmul.f32 %v1253, 1.442695
    %v1257 = vpow.pop %v1256
    %v1258 = vmul.f32 %v1254, 1.442695
    %v1259 = vpow.pop %v1258
    %v1260 = vmul.f32 %v1255, 1.442695
    %v1261 = vpow.pop %v1260
    %v1262 = vadd.f32 %v1257, 1.0
    %v1263 = vadd.f32 %v1259, 1.0
    %v1264 = vadd.f32 %v1261, 1.0
    %v1265 = vrcp.pop %v1262
    %v1266 = vmul.f32 1.0, %v1265
    %v1267 = vrcp.pop %v1263
    %v1268 = vmul.f32 1.0, %v1267
    %v1269 = vrcp.pop %v1264
    %v1270 = vmul.f32 1.0, %v1269
    %v1271 = vtanh.pop %v1252
    %v1272 = vmul.f32 %v1268, %v1161
    %v1273 = vmul.f32 %v1266, %v1271
    %v1274 = vadd.f32 %v1272, %v1273
    %v1275 = vtanh.pop %v1274
    %v1276 = vmul.f32 %v1270, %v1275
    %s1277 = sadd.s32 %s880, 1
    %v1278 = vstv %s1277
    %vm1279 = vcmp.lt.s32.totalorder %v1278, %v879
    %v1280 = vsel %vm1279, %v1276, %v1160
    %v1281 = vsel %vm1279, %v1274, %v1161
    %v1282 = vld [vmem:[%s546] sm:$0xff]
    %v1283 = vld [vmem:[%s546 + $0x8] sm:$0xff]
    %v1284 = vld [vmem:[%s546 + $0x10] sm:$0xff]
    %v1285 = vld [vmem:[%s546 + $0x18] sm:$0xff]
    %v1286 = vpack.c.bf16 %v1280, %v1280
    %1287 = vmatprep.subr.bf16.mxu0 %v1013
    %1288 = vmatpush1.bf16.msra.mxu0 %v1012
    %1289 = vmatprep.subr.bf16.mxu0 %v1009
    %1290 = vmatpush1.bf16.msra.mxu0 %v1008
    %1291 = vmatprep.subr.bf16.mxu0 %v1005
    %1292 = vmatpush1.bf16.msra.mxu0 %v1004
    %1293 = vmatprep.subr.bf16.mxu0 %v1001
    %1294 = vmatpush1.bf16.msra.mxu0 %v1000
    %1295 = vmatprep.subr.bf16.mxu0 %v997
    %1296 = vmatpush1.bf16.msra.mxu0 %v996
    %1297 = vmatprep.subr.bf16.mxu0 %v993
    %1298 = vmatpush1.bf16.msra.mxu0 %v992
    %1299 = vmatprep.subr.bf16.mxu0 %v989
    %1300 = vmatpush1.bf16.msra.mxu0 %v988
    %1301 = vmatprep.subr.bf16.mxu0 %v985
    %1302 = vmatpush1.bf16.msra.mxu0 %v984
    %1303 = vmatprep.subr.bf16.mxu0 0
    %1304 = vmatpush2.bf16.msra.mxu0 0
    %1305 = vmatprep.subr.bf16.mxu0 0
    %1306 = vmatpush2.bf16.msra.mxu0 0
    %1307 = vmatprep.subr.bf16.mxu0 0
    %1308 = vmatpush2.bf16.msra.mxu0 0
    %1309 = vmatprep.subr.bf16.mxu0 0
    %1310 = vmatpush2.bf16.msra.mxu0 0
    %1311 = vmatprep.subr.bf16.mxu0 0
    %1312 = vmatpush2.bf16.msra.mxu0 0
    %1313 = vmatprep.subr.bf16.mxu0 0
    %1314 = vmatpush2.bf16.msra.mxu0 0
    %1315 = vmatprep.subr.bf16.mxu0 0
    %1316 = vmatpush2.bf16.msra.mxu0 0
    %1317 = vmatprep.subr.bf16.mxu0 0
    %1318 = vmatpush2.bf16.msra.mxu0 0
    %1319 = vmatprep.mubr.bf16.mxu0 0
    %1320 = vmatmul.mubr.bf16.gmra.mxu0 %v1286
    %v1321 = vpop.f32.mrf.mxu0
    %v1322 = vadd.f32 0.0, %v1321
    %v1323 = vpop.f32.mrf.mxu0
    %v1324 = vadd.f32 0.0, %v1323
    %v1325 = vpop.f32.mrf.mxu0
    %v1326 = vpop.f32.mrf.mxu0
    %1327 = vdwg.mxu0
    %1328 = vmatprep.subr.bf16.mxu0 %v1015
    %1329 = vmatpush1.bf16.msra.mxu0 %v1014
    %1330 = vmatprep.subr.bf16.mxu0 %v1011
    %1331 = vmatpush1.bf16.msra.mxu0 %v1010
    %1332 = vmatprep.subr.bf16.mxu0 %v1007
    %1333 = vmatpush1.bf16.msra.mxu0 %v1006
    %1334 = vmatprep.subr.bf16.mxu0 %v1003
    %1335 = vmatpush1.bf16.msra.mxu0 %v1002
    %1336 = vmatprep.subr.bf16.mxu0 %v999
    %1337 = vmatpush1.bf16.msra.mxu0 %v998
    %1338 = vmatprep.subr.bf16.mxu0 %v995
    %1339 = vmatpush1.bf16.msra.mxu0 %v994
    %1340 = vmatprep.subr.bf16.mxu0 %v991
    %1341 = vmatpush1.bf16.msra.mxu0 %v990
    %1342 = vmatprep.subr.bf16.mxu0 %v987
    %1343 = vmatpush1.bf16.msra.mxu0 %v986
    %1344 = vmatprep.subr.bf16.mxu0 0
    %1345 = vmatpush2.bf16.msra.mxu0 0
    %1346 = vmatprep.subr.bf16.mxu0 0
    %1347 = vmatpush2.bf16.msra.mxu0 0
    %1348 = vmatprep.subr.bf16.mxu0 0
    %1349 = vmatpush2.bf16.msra.mxu0 0
    %1350 = vmatprep.subr.bf16.mxu0 0
    %1351 = vmatpush2.bf16.msra.mxu0 0
    %1352 = vmatprep.subr.bf16.mxu0 0
    %1353 = vmatpush2.bf16.msra.mxu0 0
    %1354 = vmatprep.subr.bf16.mxu0 0
    %1355 = vmatpush2.bf16.msra.mxu0 0
    %1356 = vmatprep.subr.bf16.mxu0 0
    %1357 = vmatpush2.bf16.msra.mxu0 0
    %1358 = vmatprep.subr.bf16.mxu0 0
    %1359 = vmatpush2.bf16.msra.mxu0 0
    %1360 = vmatprep.mubr.bf16.mxu0 0
    %1361 = vmatmul.mubr.bf16.gmra.mxu0 %v1286
    %v1362 = vpop.f32.mrf.mxu0
    %v1363 = vadd.f32 0.0, %v1362
    %v1364 = vpop.f32.mrf.mxu0
    %v1365 = vadd.f32 0.0, %v1364
    %v1366 = vpop.f32.mrf.mxu0
    %v1367 = vpop.f32.mrf.mxu0
    %1368 = vdwg.mxu0
    %v1369 = vadd.f32 %v1282, %v1322
    %v1370 = vadd.f32 %v1283, %v1324
    %v1371 = vadd.f32 %v1284, %v1363
    %v1372 = vadd.f32 %v1285, %v1365
    %v1373 = vxor.u32 %v1369, 2147483648
    %v1374 = vxor.u32 %v1370, 2147483648
    %v1375 = vxor.u32 %v1371, 2147483648
    %v1376 = vmul.f32 %v1373, 1.442695
    %v1377 = vpow.pop %v1376
    %v1378 = vmul.f32 %v1374, 1.442695
    %v1379 = vpow.pop %v1378
    %v1380 = vmul.f32 %v1375, 1.442695
    %v1381 = vpow.pop %v1380
    %v1382 = vadd.f32 %v1377, 1.0
    %v1383 = vadd.f32 %v1379, 1.0
    %v1384 = vadd.f32 %v1381, 1.0
    %v1385 = vrcp.pop %v1382
    %v1386 = vmul.f32 1.0, %v1385
    %v1387 = vrcp.pop %v1383
    %v1388 = vmul.f32 1.0, %v1387
    %v1389 = vrcp.pop %v1384
    %v1390 = vmul.f32 1.0, %v1389
    %v1391 = vtanh.pop %v1372
    %v1392 = vmul.f32 %v1388, %v1281
    %v1393 = vmul.f32 %v1386, %v1391
    %v1394 = vadd.f32 %v1392, %v1393
    %v1395 = vtanh.pop %v1394
    %v1396 = vmul.f32 %v1390, %v1395
    %s1397 = sadd.s32 %s880, 2
    %v1398 = vstv %s1397
    %vm1399 = vcmp.lt.s32.totalorder %v1398, %v879
    %v1400 = vsel %vm1399, %v1396, %v1280
    %v1401 = vsel %vm1399, %v1394, %v1281
    %v1402 = vld [vmem:[%s611] sm:$0xff]
    %v1403 = vld [vmem:[%s611 + $0x8] sm:$0xff]
    %v1404 = vld [vmem:[%s611 + $0x10] sm:$0xff]
    %v1405 = vld [vmem:[%s611 + $0x18] sm:$0xff]
    %v1406 = vpack.c.bf16 %v1400, %v1400
    %1407 = vmatprep.subr.bf16.mxu0 %v1013
    %1408 = vmatpush1.bf16.msra.mxu0 %v1012
    %1409 = vmatprep.subr.bf16.mxu0 %v1009
    %1410 = vmatpush1.bf16.msra.mxu0 %v1008
    %1411 = vmatprep.subr.bf16.mxu0 %v1005
    %1412 = vmatpush1.bf16.msra.mxu0 %v1004
    %1413 = vmatprep.subr.bf16.mxu0 %v1001
    %1414 = vmatpush1.bf16.msra.mxu0 %v1000
    %1415 = vmatprep.subr.bf16.mxu0 %v997
    %1416 = vmatpush1.bf16.msra.mxu0 %v996
    %1417 = vmatprep.subr.bf16.mxu0 %v993
    %1418 = vmatpush1.bf16.msra.mxu0 %v992
    %1419 = vmatprep.subr.bf16.mxu0 %v989
    %1420 = vmatpush1.bf16.msra.mxu0 %v988
    %1421 = vmatprep.subr.bf16.mxu0 %v985
    %1422 = vmatpush1.bf16.msra.mxu0 %v984
    %1423 = vmatprep.subr.bf16.mxu0 0
    %1424 = vmatpush2.bf16.msra.mxu0 0
    %1425 = vmatprep.subr.bf16.mxu0 0
    %1426 = vmatpush2.bf16.msra.mxu0 0
    %1427 = vmatprep.subr.bf16.mxu0 0
    %1428 = vmatpush2.bf16.msra.mxu0 0
    %1429 = vmatprep.subr.bf16.mxu0 0
    %1430 = vmatpush2.bf16.msra.mxu0 0
    %1431 = vmatprep.subr.bf16.mxu0 0
    %1432 = vmatpush2.bf16.msra.mxu0 0
    %1433 = vmatprep.subr.bf16.mxu0 0
    %1434 = vmatpush2.bf16.msra.mxu0 0
    %1435 = vmatprep.subr.bf16.mxu0 0
    %1436 = vmatpush2.bf16.msra.mxu0 0
    %1437 = vmatprep.subr.bf16.mxu0 0
    %1438 = vmatpush2.bf16.msra.mxu0 0
    %1439 = vmatprep.mubr.bf16.mxu0 0
    %1440 = vmatmul.mubr.bf16.gmra.mxu0 %v1406
    %v1441 = vpop.f32.mrf.mxu0
    %v1442 = vadd.f32 0.0, %v1441
    %v1443 = vpop.f32.mrf.mxu0
    %v1444 = vadd.f32 0.0, %v1443
    %v1445 = vpop.f32.mrf.mxu0
    %v1446 = vpop.f32.mrf.mxu0
    %1447 = vdwg.mxu0
    %1448 = vmatprep.subr.bf16.mxu0 %v1015
    %1449 = vmatpush1.bf16.msra.mxu0 %v1014
    %1450 = vmatprep.subr.bf16.mxu0 %v1011
    %1451 = vmatpush1.bf16.msra.mxu0 %v1010
    %1452 = vmatprep.subr.bf16.mxu0 %v1007
    %1453 = vmatpush1.bf16.msra.mxu0 %v1006
    %1454 = vmatprep.subr.bf16.mxu0 %v1003
    %1455 = vmatpush1.bf16.msra.mxu0 %v1002
    %1456 = vmatprep.subr.bf16.mxu0 %v999
    %1457 = vmatpush1.bf16.msra.mxu0 %v998
    %1458 = vmatprep.subr.bf16.mxu0 %v995
    %1459 = vmatpush1.bf16.msra.mxu0 %v994
    %1460 = vmatprep.subr.bf16.mxu0 %v991
    %1461 = vmatpush1.bf16.msra.mxu0 %v990
    %1462 = vmatprep.subr.bf16.mxu0 %v987
    %1463 = vmatpush1.bf16.msra.mxu0 %v986
    %1464 = vmatprep.subr.bf16.mxu0 0
    %1465 = vmatpush2.bf16.msra.mxu0 0
    %1466 = vmatprep.subr.bf16.mxu0 0
    %1467 = vmatpush2.bf16.msra.mxu0 0
    %1468 = vmatprep.subr.bf16.mxu0 0
    %1469 = vmatpush2.bf16.msra.mxu0 0
    %1470 = vmatprep.subr.bf16.mxu0 0
    %1471 = vmatpush2.bf16.msra.mxu0 0
    %1472 = vmatprep.subr.bf16.mxu0 0
    %1473 = vmatpush2.bf16.msra.mxu0 0
    %1474 = vmatprep.subr.bf16.mxu0 0
    %1475 = vmatpush2.bf16.msra.mxu0 0
    %1476 = vmatprep.subr.bf16.mxu0 0
    %1477 = vmatpush2.bf16.msra.mxu0 0
    %1478 = vmatprep.subr.bf16.mxu0 0
    %1479 = vmatpush2.bf16.msra.mxu0 0
    %1480 = vmatprep.mubr.bf16.mxu0 0
    %1481 = vmatmul.mubr.bf16.gmra.mxu0 %v1406
    %v1482 = vpop.f32.mrf.mxu0
    %v1483 = vadd.f32 0.0, %v1482
    %v1484 = vpop.f32.mrf.mxu0
    %v1485 = vadd.f32 0.0, %v1484
    %v1486 = vpop.f32.mrf.mxu0
    %v1487 = vpop.f32.mrf.mxu0
    %1488 = vdwg.mxu0
    %v1489 = vadd.f32 %v1402, %v1442
    %v1490 = vadd.f32 %v1403, %v1444
    %v1491 = vadd.f32 %v1404, %v1483
    %v1492 = vadd.f32 %v1405, %v1485
    %v1493 = vxor.u32 %v1489, 2147483648
    %v1494 = vxor.u32 %v1490, 2147483648
    %v1495 = vxor.u32 %v1491, 2147483648
    %v1496 = vmul.f32 %v1493, 1.442695
    %v1497 = vpow.pop %v1496
    %v1498 = vmul.f32 %v1494, 1.442695
    %v1499 = vpow.pop %v1498
    %v1500 = vmul.f32 %v1495, 1.442695
    %v1501 = vpow.pop %v1500
    %v1502 = vadd.f32 %v1497, 1.0
    %v1503 = vadd.f32 %v1499, 1.0
    %v1504 = vadd.f32 %v1501, 1.0
    %v1505 = vrcp.pop %v1502
    %v1506 = vmul.f32 1.0, %v1505
    %v1507 = vrcp.pop %v1503
    %v1508 = vmul.f32 1.0, %v1507
    %v1509 = vrcp.pop %v1504
    %v1510 = vmul.f32 1.0, %v1509
    %v1511 = vtanh.pop %v1492
    %v1512 = vmul.f32 %v1508, %v1401
    %v1513 = vmul.f32 %v1506, %v1511
    %v1514 = vadd.f32 %v1512, %v1513
    %v1515 = vtanh.pop %v1514
    %v1516 = vmul.f32 %v1510, %v1515
    %s1517 = sadd.s32 %s880, 3
    %v1518 = vstv %s1517
    %vm1519 = vcmp.lt.s32.totalorder %v1518, %v879
    %v1520 = vsel %vm1519, %v1516, %v1400
    %v1521 = vsel %vm1519, %v1514, %v1401
    %v1522 = vld [vmem:[%s676] sm:$0xff]
    %v1523 = vld [vmem:[%s676 + $0x8] sm:$0xff]
    %v1524 = vld [vmem:[%s676 + $0x10] sm:$0xff]
    %v1525 = vld [vmem:[%s676 + $0x18] sm:$0xff]
    %v1526 = vpack.c.bf16 %v1520, %v1520
    %1527 = vmatprep.subr.bf16.mxu0 %v1013
    %1528 = vmatpush1.bf16.msra.mxu0 %v1012
    %1529 = vmatprep.subr.bf16.mxu0 %v1009
    %1530 = vmatpush1.bf16.msra.mxu0 %v1008
    %1531 = vmatprep.subr.bf16.mxu0 %v1005
    %1532 = vmatpush1.bf16.msra.mxu0 %v1004
    %1533 = vmatprep.subr.bf16.mxu0 %v1001
    %1534 = vmatpush1.bf16.msra.mxu0 %v1000
    %1535 = vmatprep.subr.bf16.mxu0 %v997
    %1536 = vmatpush1.bf16.msra.mxu0 %v996
    %1537 = vmatprep.subr.bf16.mxu0 %v993
    %1538 = vmatpush1.bf16.msra.mxu0 %v992
    %1539 = vmatprep.subr.bf16.mxu0 %v989
    %1540 = vmatpush1.bf16.msra.mxu0 %v988
    %1541 = vmatprep.subr.bf16.mxu0 %v985
    %1542 = vmatpush1.bf16.msra.mxu0 %v984
    %1543 = vmatprep.subr.bf16.mxu0 0
    %1544 = vmatpush2.bf16.msra.mxu0 0
    %1545 = vmatprep.subr.bf16.mxu0 0
    %1546 = vmatpush2.bf16.msra.mxu0 0
    %1547 = vmatprep.subr.bf16.mxu0 0
    %1548 = vmatpush2.bf16.msra.mxu0 0
    %1549 = vmatprep.subr.bf16.mxu0 0
    %1550 = vmatpush2.bf16.msra.mxu0 0
    %1551 = vmatprep.subr.bf16.mxu0 0
    %1552 = vmatpush2.bf16.msra.mxu0 0
    %1553 = vmatprep.subr.bf16.mxu0 0
    %1554 = vmatpush2.bf16.msra.mxu0 0
    %1555 = vmatprep.subr.bf16.mxu0 0
    %1556 = vmatpush2.bf16.msra.mxu0 0
    %1557 = vmatprep.subr.bf16.mxu0 0
    %1558 = vmatpush2.bf16.msra.mxu0 0
    %1559 = vmatprep.mubr.bf16.mxu0 0
    %1560 = vmatmul.mubr.bf16.gmra.mxu0 %v1526
    %v1561 = vpop.f32.mrf.mxu0
    %v1562 = vadd.f32 0.0, %v1561
    %v1563 = vpop.f32.mrf.mxu0
    %v1564 = vadd.f32 0.0, %v1563
    %v1565 = vpop.f32.mrf.mxu0
    %v1566 = vpop.f32.mrf.mxu0
    %1567 = vdwg.mxu0
    %1568 = vmatprep.subr.bf16.mxu0 %v1015
    %1569 = vmatpush1.bf16.msra.mxu0 %v1014
    %1570 = vmatprep.subr.bf16.mxu0 %v1011
    %1571 = vmatpush1.bf16.msra.mxu0 %v1010
    %1572 = vmatprep.subr.bf16.mxu0 %v1007
    %1573 = vmatpush1.bf16.msra.mxu0 %v1006
    %1574 = vmatprep.subr.bf16.mxu0 %v1003
    %1575 = vmatpush1.bf16.msra.mxu0 %v1002
    %1576 = vmatprep.subr.bf16.mxu0 %v999
    %1577 = vmatpush1.bf16.msra.mxu0 %v998
    %1578 = vmatprep.subr.bf16.mxu0 %v995
    %1579 = vmatpush1.bf16.msra.mxu0 %v994
    %1580 = vmatprep.subr.bf16.mxu0 %v991
    %1581 = vmatpush1.bf16.msra.mxu0 %v990
    %1582 = vmatprep.subr.bf16.mxu0 %v987
    %1583 = vmatpush1.bf16.msra.mxu0 %v986
    %1584 = vmatprep.subr.bf16.mxu0 0
    %1585 = vmatpush2.bf16.msra.mxu0 0
    %1586 = vmatprep.subr.bf16.mxu0 0
    %1587 = vmatpush2.bf16.msra.mxu0 0
    %1588 = vmatprep.subr.bf16.mxu0 0
    %1589 = vmatpush2.bf16.msra.mxu0 0
    %1590 = vmatprep.subr.bf16.mxu0 0
    %1591 = vmatpush2.bf16.msra.mxu0 0
    %1592 = vmatprep.subr.bf16.mxu0 0
    %1593 = vmatpush2.bf16.msra.mxu0 0
    %1594 = vmatprep.subr.bf16.mxu0 0
    %1595 = vmatpush2.bf16.msra.mxu0 0
    %1596 = vmatprep.subr.bf16.mxu0 0
    %1597 = vmatpush2.bf16.msra.mxu0 0
    %1598 = vmatprep.subr.bf16.mxu0 0
    %1599 = vmatpush2.bf16.msra.mxu0 0
    %1600 = vmatprep.mubr.bf16.mxu0 0
    %1601 = vmatmul.mubr.bf16.gmra.mxu0 %v1526
    %v1602 = vpop.f32.mrf.mxu0
    %v1603 = vadd.f32 0.0, %v1602
    %v1604 = vpop.f32.mrf.mxu0
    %v1605 = vadd.f32 0.0, %v1604
    %v1606 = vpop.f32.mrf.mxu0
    %v1607 = vpop.f32.mrf.mxu0
    %1608 = vdwg.mxu0
    %v1609 = vadd.f32 %v1522, %v1562
    %v1610 = vadd.f32 %v1523, %v1564
    %v1611 = vadd.f32 %v1524, %v1603
    %v1612 = vadd.f32 %v1525, %v1605
    %v1613 = vxor.u32 %v1609, 2147483648
    %v1614 = vxor.u32 %v1610, 2147483648
    %v1615 = vxor.u32 %v1611, 2147483648
    %v1616 = vmul.f32 %v1613, 1.442695
    %v1617 = vpow.pop %v1616
    %v1618 = vmul.f32 %v1614, 1.442695
    %v1619 = vpow.pop %v1618
    %v1620 = vmul.f32 %v1615, 1.442695
    %v1621 = vpow.pop %v1620
    %v1622 = vadd.f32 %v1617, 1.0
    %v1623 = vadd.f32 %v1619, 1.0
    %v1624 = vadd.f32 %v1621, 1.0
    %v1625 = vrcp.pop %v1622
    %v1626 = vmul.f32 1.0, %v1625
    %v1627 = vrcp.pop %v1623
    %v1628 = vmul.f32 1.0, %v1627
    %v1629 = vrcp.pop %v1624
    %v1630 = vmul.f32 1.0, %v1629
    %v1631 = vtanh.pop %v1612
    %v1632 = vmul.f32 %v1628, %v1521
    %v1633 = vmul.f32 %v1626, %v1631
    %v1634 = vadd.f32 %v1632, %v1633
    %v1635 = vtanh.pop %v1634
    %v1636 = vmul.f32 %v1630, %v1635
    %s1637 = sadd.s32 %s880, 4
    %v1638 = vstv %s1637
    %vm1639 = vcmp.lt.s32.totalorder %v1638, %v879
    %v1640 = vsel %vm1639, %v1636, %v1520
    %v1641 = vsel %vm1639, %v1634, %v1521
    %v1642 = vld [vmem:[%s741] sm:$0xff]
    %v1643 = vld [vmem:[%s741 + $0x8] sm:$0xff]
    %v1644 = vld [vmem:[%s741 + $0x10] sm:$0xff]
    %v1645 = vld [vmem:[%s741 + $0x18] sm:$0xff]
    %v1646 = vpack.c.bf16 %v1640, %v1640
    %1647 = vmatprep.subr.bf16.mxu0 %v1013
    %1648 = vmatpush1.bf16.msra.mxu0 %v1012
    %1649 = vmatprep.subr.bf16.mxu0 %v1009
    %1650 = vmatpush1.bf16.msra.mxu0 %v1008
    %1651 = vmatprep.subr.bf16.mxu0 %v1005
    %1652 = vmatpush1.bf16.msra.mxu0 %v1004
    %1653 = vmatprep.subr.bf16.mxu0 %v1001
    %1654 = vmatpush1.bf16.msra.mxu0 %v1000
    %1655 = vmatprep.subr.bf16.mxu0 %v997
    %1656 = vmatpush1.bf16.msra.mxu0 %v996
    %1657 = vmatprep.subr.bf16.mxu0 %v993
    %1658 = vmatpush1.bf16.msra.mxu0 %v992
    %1659 = vmatprep.subr.bf16.mxu0 %v989
    %1660 = vmatpush1.bf16.msra.mxu0 %v988
    %1661 = vmatprep.subr.bf16.mxu0 %v985
    %1662 = vmatpush1.bf16.msra.mxu0 %v984
    %1663 = vmatprep.subr.bf16.mxu0 0
    %1664 = vmatpush2.bf16.msra.mxu0 0
    %1665 = vmatprep.subr.bf16.mxu0 0
    %1666 = vmatpush2.bf16.msra.mxu0 0
    %1667 = vmatprep.subr.bf16.mxu0 0
    %1668 = vmatpush2.bf16.msra.mxu0 0
    %1669 = vmatprep.subr.bf16.mxu0 0
    %1670 = vmatpush2.bf16.msra.mxu0 0
    %1671 = vmatprep.subr.bf16.mxu0 0
    %1672 = vmatpush2.bf16.msra.mxu0 0
    %1673 = vmatprep.subr.bf16.mxu0 0
    %1674 = vmatpush2.bf16.msra.mxu0 0
    %1675 = vmatprep.subr.bf16.mxu0 0
    %1676 = vmatpush2.bf16.msra.mxu0 0
    %1677 = vmatprep.subr.bf16.mxu0 0
    %1678 = vmatpush2.bf16.msra.mxu0 0
    %1679 = vmatprep.mubr.bf16.mxu0 0
    %1680 = vmatmul.mubr.bf16.gmra.mxu0 %v1646
    %v1681 = vpop.f32.mrf.mxu0
    %v1682 = vadd.f32 0.0, %v1681
    %v1683 = vpop.f32.mrf.mxu0
    %v1684 = vadd.f32 0.0, %v1683
    %v1685 = vpop.f32.mrf.mxu0
    %v1686 = vpop.f32.mrf.mxu0
    %1687 = vdwg.mxu0
    %1688 = vmatprep.subr.bf16.mxu0 %v1015
    %1689 = vmatpush1.bf16.msra.mxu0 %v1014
    %1690 = vmatprep.subr.bf16.mxu0 %v1011
    %1691 = vmatpush1.bf16.msra.mxu0 %v1010
    %1692 = vmatprep.subr.bf16.mxu0 %v1007
    %1693 = vmatpush1.bf16.msra.mxu0 %v1006
    %1694 = vmatprep.subr.bf16.mxu0 %v1003
    %1695 = vmatpush1.bf16.msra.mxu0 %v1002
    %1696 = vmatprep.subr.bf16.mxu0 %v999
    %1697 = vmatpush1.bf16.msra.mxu0 %v998
    %1698 = vmatprep.subr.bf16.mxu0 %v995
    %1699 = vmatpush1.bf16.msra.mxu0 %v994
    %1700 = vmatprep.subr.bf16.mxu0 %v991
    %1701 = vmatpush1.bf16.msra.mxu0 %v990
    %1702 = vmatprep.subr.bf16.mxu0 %v987
    %1703 = vmatpush1.bf16.msra.mxu0 %v986
    %1704 = vmatprep.subr.bf16.mxu0 0
    %1705 = vmatpush2.bf16.msra.mxu0 0
    %1706 = vmatprep.subr.bf16.mxu0 0
    %1707 = vmatpush2.bf16.msra.mxu0 0
    %1708 = vmatprep.subr.bf16.mxu0 0
    %1709 = vmatpush2.bf16.msra.mxu0 0
    %1710 = vmatprep.subr.bf16.mxu0 0
    %1711 = vmatpush2.bf16.msra.mxu0 0
    %1712 = vmatprep.subr.bf16.mxu0 0
    %1713 = vmatpush2.bf16.msra.mxu0 0
    %1714 = vmatprep.subr.bf16.mxu0 0
    %1715 = vmatpush2.bf16.msra.mxu0 0
    %1716 = vmatprep.subr.bf16.mxu0 0
    %1717 = vmatpush2.bf16.msra.mxu0 0
    %1718 = vmatprep.subr.bf16.mxu0 0
    %1719 = vmatpush2.bf16.msra.mxu0 0
    %1720 = vmatprep.mubr.bf16.mxu0 0
    %1721 = vmatmul.mubr.bf16.gmra.mxu0 %v1646
    %v1722 = vpop.f32.mrf.mxu0
    %v1723 = vadd.f32 0.0, %v1722
    %v1724 = vpop.f32.mrf.mxu0
    %v1725 = vadd.f32 0.0, %v1724
    %v1726 = vpop.f32.mrf.mxu0
    %v1727 = vpop.f32.mrf.mxu0
    %1728 = vdwg.mxu0
    %v1729 = vadd.f32 %v1642, %v1682
    %v1730 = vadd.f32 %v1643, %v1684
    %v1731 = vadd.f32 %v1644, %v1723
    %v1732 = vadd.f32 %v1645, %v1725
    %v1733 = vxor.u32 %v1729, 2147483648
    %v1734 = vxor.u32 %v1730, 2147483648
    %v1735 = vxor.u32 %v1731, 2147483648
    %v1736 = vmul.f32 %v1733, 1.442695
    %v1737 = vpow.pop %v1736
    %v1738 = vmul.f32 %v1734, 1.442695
    %v1739 = vpow.pop %v1738
    %v1740 = vmul.f32 %v1735, 1.442695
    %v1741 = vpow.pop %v1740
    %v1742 = vadd.f32 %v1737, 1.0
    %v1743 = vadd.f32 %v1739, 1.0
    %v1744 = vadd.f32 %v1741, 1.0
    %v1745 = vrcp.pop %v1742
    %v1746 = vmul.f32 1.0, %v1745
    %v1747 = vrcp.pop %v1743
    %v1748 = vmul.f32 1.0, %v1747
    %v1749 = vrcp.pop %v1744
    %v1750 = vmul.f32 1.0, %v1749
    %v1751 = vtanh.pop %v1732
    %v1752 = vmul.f32 %v1748, %v1641
    %v1753 = vmul.f32 %v1746, %v1751
    %v1754 = vadd.f32 %v1752, %v1753
    %v1755 = vtanh.pop %v1754
    %v1756 = vmul.f32 %v1750, %v1755
    %s1757 = sadd.s32 %s880, 5
    %v1758 = vstv %s1757
    %vm1759 = vcmp.lt.s32.totalorder %v1758, %v879
    %v1760 = vsel %vm1759, %v1756, %v1640
    %v1761 = vsel %vm1759, %v1754, %v1641
    %v1762 = vld [vmem:[%s806] sm:$0xff]
    %v1763 = vld [vmem:[%s806 + $0x8] sm:$0xff]
    %v1764 = vld [vmem:[%s806 + $0x10] sm:$0xff]
    %v1765 = vld [vmem:[%s806 + $0x18] sm:$0xff]
    %v1766 = vpack.c.bf16 %v1760, %v1760
    %1767 = vmatprep.subr.bf16.mxu0 %v1013
    %1768 = vmatpush1.bf16.msra.mxu0 %v1012
    %1769 = vmatprep.subr.bf16.mxu0 %v1009
    %1770 = vmatpush1.bf16.msra.mxu0 %v1008
    %1771 = vmatprep.subr.bf16.mxu0 %v1005
    %1772 = vmatpush1.bf16.msra.mxu0 %v1004
    %1773 = vmatprep.subr.bf16.mxu0 %v1001
    %1774 = vmatpush1.bf16.msra.mxu0 %v1000
    %1775 = vmatprep.subr.bf16.mxu0 %v997
    %1776 = vmatpush1.bf16.msra.mxu0 %v996
    %1777 = vmatprep.subr.bf16.mxu0 %v993
    %1778 = vmatpush1.bf16.msra.mxu0 %v992
    %1779 = vmatprep.subr.bf16.mxu0 %v989
    %1780 = vmatpush1.bf16.msra.mxu0 %v988
    %1781 = vmatprep.subr.bf16.mxu0 %v985
    %1782 = vmatpush1.bf16.msra.mxu0 %v984
    %1783 = vmatprep.subr.bf16.mxu0 0
    %1784 = vmatpush2.bf16.msra.mxu0 0
    %1785 = vmatprep.subr.bf16.mxu0 0
    %1786 = vmatpush2.bf16.msra.mxu0 0
    %1787 = vmatprep.subr.bf16.mxu0 0
    %1788 = vmatpush2.bf16.msra.mxu0 0
    %1789 = vmatprep.subr.bf16.mxu0 0
    %1790 = vmatpush2.bf16.msra.mxu0 0
    %1791 = vmatprep.subr.bf16.mxu0 0
    %1792 = vmatpush2.bf16.msra.mxu0 0
    %1793 = vmatprep.subr.bf16.mxu0 0
    %1794 = vmatpush2.bf16.msra.mxu0 0
    %1795 = vmatprep.subr.bf16.mxu0 0
    %1796 = vmatpush2.bf16.msra.mxu0 0
    %1797 = vmatprep.subr.bf16.mxu0 0
    %1798 = vmatpush2.bf16.msra.mxu0 0
    %1799 = vmatprep.mubr.bf16.mxu0 0
    %1800 = vmatmul.mubr.bf16.gmra.mxu0 %v1766
    %v1801 = vpop.f32.mrf.mxu0
    %v1802 = vadd.f32 0.0, %v1801
    %v1803 = vpop.f32.mrf.mxu0
    %v1804 = vadd.f32 0.0, %v1803
    %v1805 = vpop.f32.mrf.mxu0
    %v1806 = vpop.f32.mrf.mxu0
    %1807 = vdwg.mxu0
    %1808 = vmatprep.subr.bf16.mxu0 %v1015
    %1809 = vmatpush1.bf16.msra.mxu0 %v1014
    %1810 = vmatprep.subr.bf16.mxu0 %v1011
    %1811 = vmatpush1.bf16.msra.mxu0 %v1010
    %1812 = vmatprep.subr.bf16.mxu0 %v1007
    %1813 = vmatpush1.bf16.msra.mxu0 %v1006
    %1814 = vmatprep.subr.bf16.mxu0 %v1003
    %1815 = vmatpush1.bf16.msra.mxu0 %v1002
    %1816 = vmatprep.subr.bf16.mxu0 %v999
    %1817 = vmatpush1.bf16.msra.mxu0 %v998
    %1818 = vmatprep.subr.bf16.mxu0 %v995
    %1819 = vmatpush1.bf16.msra.mxu0 %v994
    %1820 = vmatprep.subr.bf16.mxu0 %v991
    %1821 = vmatpush1.bf16.msra.mxu0 %v990
    %1822 = vmatprep.subr.bf16.mxu0 %v987
    %1823 = vmatpush1.bf16.msra.mxu0 %v986
    %1824 = vmatprep.subr.bf16.mxu0 0
    %1825 = vmatpush2.bf16.msra.mxu0 0
    %1826 = vmatprep.subr.bf16.mxu0 0
    %1827 = vmatpush2.bf16.msra.mxu0 0
    %1828 = vmatprep.subr.bf16.mxu0 0
    %1829 = vmatpush2.bf16.msra.mxu0 0
    %1830 = vmatprep.subr.bf16.mxu0 0
    %1831 = vmatpush2.bf16.msra.mxu0 0
    %1832 = vmatprep.subr.bf16.mxu0 0
    %1833 = vmatpush2.bf16.msra.mxu0 0
    %1834 = vmatprep.subr.bf16.mxu0 0
    %1835 = vmatpush2.bf16.msra.mxu0 0
    %1836 = vmatprep.subr.bf16.mxu0 0
    %1837 = vmatpush2.bf16.msra.mxu0 0
    %1838 = vmatprep.subr.bf16.mxu0 0
    %1839 = vmatpush2.bf16.msra.mxu0 0
    %1840 = vmatprep.mubr.bf16.mxu0 0
    %1841 = vmatmul.mubr.bf16.gmra.mxu0 %v1766
    %v1842 = vpop.f32.mrf.mxu0
    %v1843 = vadd.f32 0.0, %v1842
    %v1844 = vpop.f32.mrf.mxu0
    %v1845 = vadd.f32 0.0, %v1844
    %v1846 = vpop.f32.mrf.mxu0
    %v1847 = vpop.f32.mrf.mxu0
    %1848 = vdwg.mxu0
    %v1849 = vadd.f32 %v1762, %v1802
    %v1850 = vadd.f32 %v1763, %v1804
    %v1851 = vadd.f32 %v1764, %v1843
    %v1852 = vadd.f32 %v1765, %v1845
    %v1853 = vxor.u32 %v1849, 2147483648
    %v1854 = vxor.u32 %v1850, 2147483648
    %v1855 = vxor.u32 %v1851, 2147483648
    %v1856 = vmul.f32 %v1853, 1.442695
    %v1857 = vpow.pop %v1856
    %v1858 = vmul.f32 %v1854, 1.442695
    %v1859 = vpow.pop %v1858
    %v1860 = vmul.f32 %v1855, 1.442695
    %v1861 = vpow.pop %v1860
    %v1862 = vadd.f32 %v1857, 1.0
    %v1863 = vadd.f32 %v1859, 1.0
    %v1864 = vadd.f32 %v1861, 1.0
    %v1865 = vrcp.pop %v1862
    %v1866 = vmul.f32 1.0, %v1865
    %v1867 = vrcp.pop %v1863
    %v1868 = vmul.f32 1.0, %v1867
    %v1869 = vrcp.pop %v1864
    %v1870 = vmul.f32 1.0, %v1869
    %v1871 = vtanh.pop %v1852
    %v1872 = vmul.f32 %v1868, %v1761
    %v1873 = vmul.f32 %v1866, %v1871
    %v1874 = vadd.f32 %v1872, %v1873
    %v1875 = vtanh.pop %v1874
    %v1876 = vmul.f32 %v1870, %v1875
    %s1877 = sadd.s32 %s880, 6
    %v1878 = vstv %s1877
    %vm1879 = vcmp.lt.s32.totalorder %v1878, %v879
    %v1880 = vsel %vm1879, %v1876, %v1760
    %v1881 = vsel %vm1879, %v1874, %v1761
    %v1882 = vld [vmem:[%s871] sm:$0xff]
    %v1883 = vld [vmem:[%s871 + $0x8] sm:$0xff]
    %v1884 = vld [vmem:[%s871 + $0x10] sm:$0xff]
    %v1885 = vld [vmem:[%s871 + $0x18] sm:$0xff]
    %v1886 = vpack.c.bf16 %v1880, %v1880
    %1887 = vmatprep.subr.bf16.mxu0 %v1013
    %1888 = vmatpush1.bf16.msra.mxu0 %v1012
    %1889 = vmatprep.subr.bf16.mxu0 %v1009
    %1890 = vmatpush1.bf16.msra.mxu0 %v1008
    %1891 = vmatprep.subr.bf16.mxu0 %v1005
    %1892 = vmatpush1.bf16.msra.mxu0 %v1004
    %1893 = vmatprep.subr.bf16.mxu0 %v1001
    %1894 = vmatpush1.bf16.msra.mxu0 %v1000
    %1895 = vmatprep.subr.bf16.mxu0 %v997
    %1896 = vmatpush1.bf16.msra.mxu0 %v996
    %1897 = vmatprep.subr.bf16.mxu0 %v993
    %1898 = vmatpush1.bf16.msra.mxu0 %v992
    %1899 = vmatprep.subr.bf16.mxu0 %v989
    %1900 = vmatpush1.bf16.msra.mxu0 %v988
    %1901 = vmatprep.subr.bf16.mxu0 %v985
    %1902 = vmatpush1.bf16.msra.mxu0 %v984
    %1903 = vmatprep.subr.bf16.mxu0 0
    %1904 = vmatpush2.bf16.msra.mxu0 0
    %1905 = vmatprep.subr.bf16.mxu0 0
    %1906 = vmatpush2.bf16.msra.mxu0 0
    %1907 = vmatprep.subr.bf16.mxu0 0
    %1908 = vmatpush2.bf16.msra.mxu0 0
    %1909 = vmatprep.subr.bf16.mxu0 0
    %1910 = vmatpush2.bf16.msra.mxu0 0
    %1911 = vmatprep.subr.bf16.mxu0 0
    %1912 = vmatpush2.bf16.msra.mxu0 0
    %1913 = vmatprep.subr.bf16.mxu0 0
    %1914 = vmatpush2.bf16.msra.mxu0 0
    %1915 = vmatprep.subr.bf16.mxu0 0
    %1916 = vmatpush2.bf16.msra.mxu0 0
    %1917 = vmatprep.subr.bf16.mxu0 0
    %1918 = vmatpush2.bf16.msra.mxu0 0
    %1919 = vmatprep.mubr.bf16.mxu0 0
    %1920 = vmatmul.mubr.bf16.gmra.mxu0 %v1886
    %v1921 = vpop.f32.mrf.mxu0
    %v1922 = vadd.f32 0.0, %v1921
    %v1923 = vpop.f32.mrf.mxu0
    %v1924 = vadd.f32 0.0, %v1923
    %v1925 = vpop.f32.mrf.mxu0
    %v1926 = vpop.f32.mrf.mxu0
    %1927 = vdwg.mxu0
    %1928 = vmatprep.subr.bf16.mxu0 %v1015
    %1929 = vmatpush1.bf16.msra.mxu0 %v1014
    %1930 = vmatprep.subr.bf16.mxu0 %v1011
    %1931 = vmatpush1.bf16.msra.mxu0 %v1010
    %1932 = vmatprep.subr.bf16.mxu0 %v1007
    %1933 = vmatpush1.bf16.msra.mxu0 %v1006
    %1934 = vmatprep.subr.bf16.mxu0 %v1003
    %1935 = vmatpush1.bf16.msra.mxu0 %v1002
    %1936 = vmatprep.subr.bf16.mxu0 %v999
    %1937 = vmatpush1.bf16.msra.mxu0 %v998
    %1938 = vmatprep.subr.bf16.mxu0 %v995
    %1939 = vmatpush1.bf16.msra.mxu0 %v994
    %1940 = vmatprep.subr.bf16.mxu0 %v991
    %1941 = vmatpush1.bf16.msra.mxu0 %v990
    %1942 = vmatprep.subr.bf16.mxu0 %v987
    %1943 = vmatpush1.bf16.msra.mxu0 %v986
    %1944 = vmatprep.subr.bf16.mxu0 0
    %1945 = vmatpush2.bf16.msra.mxu0 0
    %1946 = vmatprep.subr.bf16.mxu0 0
    %1947 = vmatpush2.bf16.msra.mxu0 0
    %1948 = vmatprep.subr.bf16.mxu0 0
    %1949 = vmatpush2.bf16.msra.mxu0 0
    %1950 = vmatprep.subr.bf16.mxu0 0
    %1951 = vmatpush2.bf16.msra.mxu0 0
    %1952 = vmatprep.subr.bf16.mxu0 0
    %1953 = vmatpush2.bf16.msra.mxu0 0
    %1954 = vmatprep.subr.bf16.mxu0 0
    %1955 = vmatpush2.bf16.msra.mxu0 0
    %1956 = vmatprep.subr.bf16.mxu0 0
    %1957 = vmatpush2.bf16.msra.mxu0 0
    %1958 = vmatprep.subr.bf16.mxu0 0
    %1959 = vmatpush2.bf16.msra.mxu0 0
    %1960 = vmatprep.mubr.bf16.mxu0 0
    %1961 = vmatmul.mubr.bf16.gmra.mxu0 %v1886
    %v1962 = vpop.f32.mrf.mxu0
    %v1963 = vadd.f32 0.0, %v1962
    %v1964 = vpop.f32.mrf.mxu0
    %v1965 = vadd.f32 0.0, %v1964
    %v1966 = vpop.f32.mrf.mxu0
    %v1967 = vpop.f32.mrf.mxu0
    %1968 = vdwg.mxu0
    %v1969 = vadd.f32 %v1882, %v1922
    %v1970 = vadd.f32 %v1883, %v1924
    %v1971 = vadd.f32 %v1884, %v1963
    %v1972 = vadd.f32 %v1885, %v1965
    %v1973 = vxor.u32 %v1969, 2147483648
    %v1974 = vxor.u32 %v1970, 2147483648
    %v1975 = vxor.u32 %v1971, 2147483648
    %v1976 = vmul.f32 %v1973, 1.442695
    %v1977 = vpow.pop %v1976
    %v1978 = vmul.f32 %v1974, 1.442695
    %v1979 = vpow.pop %v1978
    %v1980 = vmul.f32 %v1975, 1.442695
    %v1981 = vpow.pop %v1980
    %v1982 = vadd.f32 %v1977, 1.0
    %v1983 = vadd.f32 %v1979, 1.0
    %v1984 = vadd.f32 %v1981, 1.0
    %v1985 = vrcp.pop %v1982
    %v1986 = vmul.f32 1.0, %v1985
    %v1987 = vrcp.pop %v1983
    %v1988 = vmul.f32 1.0, %v1987
    %v1989 = vrcp.pop %v1984
    %v1990 = vmul.f32 1.0, %v1989
    %v1991 = vtanh.pop %v1972
    %v1992 = vmul.f32 %v1988, %v1881
    %v1993 = vmul.f32 %v1986, %v1991
    %v1994 = vadd.f32 %v1992, %v1993
    %v1995 = vtanh.pop %v1994
    %v1996 = vmul.f32 %v1990, %v1995
    %s1997 = sadd.s32 %s880, 7
    %v1998 = vstv %s1997
    %vm1999 = vcmp.lt.s32.totalorder %v1998, %v879
    %v2000 = vsel %vm1999, %v1996, %v1880
    %v2001 = vsel %vm1999, %v1994, %v1881
    %2002 = vst [vmem:[#allocation3] sm:$0xff] %v2000
    %2003 = vst [vmem:[#allocation4] sm:$0xff] %v2001
    // Predicated region
    $region30: #{tpu_custom_call.1} parent=1 // pred_check
      %p2004 = pneg %p47
    $region31: #{tpu_custom_call.1} parent=1 // pred_check_branch
      %2006 = sbr.rel (%p2004) target = $region33
    $region32: #{tpu_custom_call.1} parent=1 // pred_region
      %v2007 = vld [vmem:[#allocation8 + $0x120] sm:$0xf]
      %v2008 = vld [vmem:[#allocation8 + $0x130] sm:$0xf]
      %v2009 = vld [vmem:[#allocation8 + $0x140] sm:$0xf]
      %v2010 = vld [vmem:[#allocation8 + $0x150] sm:$0xf]
      %v2011 = vld [vmem:[#allocation8 + $0x160] sm:$0xf]
      %v2012 = vld [vmem:[#allocation8 + $0x170] sm:$0xf]
      %v2013 = vld [vmem:[#allocation8 + $0x180] sm:$0xf]
      %v2014 = vld [vmem:[#allocation8 + $0x190] sm:$0xf]
      %v2015 = vld [vmem:[#allocation8 + $0x1a0] sm:$0xf]
      %v2016 = vld [vmem:[#allocation8 + $0x1b0] sm:$0xf]
      %v2017 = vld [vmem:[#allocation8 + $0x1c0] sm:$0xf]
      %v2018 = vld [vmem:[#allocation8 + $0x1d0] sm:$0xf]
      %v2019 = vld [vmem:[#allocation8 + $0x1e0] sm:$0xf]
      %v2020 = vld [vmem:[#allocation8 + $0x1f0] sm:$0xf]
      %v2021 = vld [vmem:[#allocation8 + $0x200] sm:$0xf]
      %v2022 = vld [vmem:[#allocation8 + $0x210] sm:$0xf]
      %v2023 = vld [vmem:[#allocation8 + $0x220] sm:$0xf]
      %v2024 = vld [vmem:[#allocation8 + $0x230] sm:$0xf]
      %v2025 = vld [vmem:[#allocation8 + $0x240] sm:$0xf]
      %v2026 = vld [vmem:[#allocation8 + $0x250] sm:$0xf]
      %v2027 = vld [vmem:[#allocation8 + $0x260] sm:$0xf]
      %v2028 = vld [vmem:[#allocation8 + $0x270] sm:$0xf]
      %v2029 = vld [vmem:[#allocation8 + $0x280] sm:$0xf]
      %v2030 = vld [vmem:[#allocation8 + $0x290] sm:$0xf]
      %v2031 = vld [vmem:[#allocation8 + $0x2a0] sm:$0xf]
      %v2032 = vld [vmem:[#allocation8 + $0x2b0] sm:$0xf]
      %v2033 = vld [vmem:[#allocation8 + $0x2c0] sm:$0xf]
      %v2034 = vld [vmem:[#allocation8 + $0x2d0] sm:$0xf]
      %v2035 = vld [vmem:[#allocation8 + $0x2e0] sm:$0xf]
      %v2036 = vld [vmem:[#allocation8 + $0x2f0] sm:$0xf]
      %v2037 = vld [vmem:[#allocation8 + $0x300] sm:$0xf]
      %v2038 = vld [vmem:[#allocation8 + $0x310] sm:$0xf]
      %v2039 = vld [vmem:[%s3 + $0x4] sm:$0x1]
      %v2040 = vld [vmem:[%s3 + $0x5] sm:$0x1]
      %v2041 = vpack.c.bf16 %v2000, %v2000
      %v2043 = vlaneseq
      %v2044 = vshrl.u32 %v2043, 7
      %v2045 = vsub.s32 0, %v2044
      %v2046 = vrot.slane %v2039, %v2045
      %v2064 = vunpack.c.l.b16 %v2007
      %v2065 = vunpack.c.l.b16 %v2008
      %v2066 = vunpack.c.l.b16 %v2009
      %v2067 = vunpack.c.l.b16 %v2010
      %v2068 = vunpack.c.l.b16 %v2011
      %v2069 = vunpack.c.l.b16 %v2012
      %v2070 = vunpack.c.l.b16 %v2013
      %v2071 = vunpack.c.l.b16 %v2014
      %v2072 = vunpack.c.l.b16 %v2015
      %v2073 = vunpack.c.l.b16 %v2016
      %v2074 = vunpack.c.l.b16 %v2017
      %v2075 = vunpack.c.l.b16 %v2018
      %v2076 = vunpack.c.l.b16 %v2019
      %v2077 = vunpack.c.l.b16 %v2020
      %v2078 = vunpack.c.l.b16 %v2021
      %v2079 = vunpack.c.l.b16 %v2022
      %v2080 = vpack.c.b16 %v2065, %v2064
      %v2081 = vpack.c.b16 %v2067, %v2066
      %v2082 = vpack.c.b16 %v2069, %v2068
      %v2083 = vpack.c.b16 %v2071, %v2070
      %v2084 = vpack.c.b16 %v2073, %v2072
      %v2085 = vpack.c.b16 %v2075, %v2074
      %v2086 = vpack.c.b16 %v2077, %v2076
      %v2087 = vpack.c.b16 %v2079, %v2078
      %2096 = vmatprep.subr.bf16.mxu0 0
      %2097 = vmatpush1.bf16.msra.mxu0 %v2087
      %2098 = vmatprep.subr.bf16.mxu0 0
      %2099 = vmatpush1.bf16.msra.mxu0 %v2086
      %2100 = vmatprep.subr.bf16.mxu0 0
      %2101 = vmatpush1.bf16.msra.mxu0 %v2085
      %2102 = vmatprep.subr.bf16.mxu0 0
      %2103 = vmatpush1.bf16.msra.mxu0 %v2084
      %2104 = vmatprep.subr.bf16.mxu0 0
      %2105 = vmatpush1.bf16.msra.mxu0 %v2083
      %2106 = vmatprep.subr.bf16.mxu0 0
      %2107 = vmatpush1.bf16.msra.mxu0 %v2082
      %2108 = vmatprep.subr.bf16.mxu0 0
      %2109 = vmatpush1.bf16.msra.mxu0 %v2081
      %2110 = vmatprep.subr.bf16.mxu0 0
      %2111 = vmatpush1.bf16.msra.mxu0 %v2080
      %2112 = vmatprep.subr.bf16.mxu0 0
      %2113 = vmatpush2.bf16.msra.mxu0 0
      %2114 = vmatprep.subr.bf16.mxu0 0
      %2115 = vmatpush2.bf16.msra.mxu0 0
      %2116 = vmatprep.subr.bf16.mxu0 0
      %2117 = vmatpush2.bf16.msra.mxu0 0
      %2118 = vmatprep.subr.bf16.mxu0 0
      %2119 = vmatpush2.bf16.msra.mxu0 0
      %2120 = vmatprep.subr.bf16.mxu0 0
      %2121 = vmatpush2.bf16.msra.mxu0 0
      %2122 = vmatprep.subr.bf16.mxu0 0
      %2123 = vmatpush2.bf16.msra.mxu0 0
      %2124 = vmatprep.subr.bf16.mxu0 0
      %2125 = vmatpush2.bf16.msra.mxu0 0
      %2126 = vmatprep.subr.bf16.mxu0 0
      %2127 = vmatpush2.bf16.msra.mxu0 0
      %2128 = vmatprep.mubr.bf16.mxu0 0
      %2129 = vmatmul.mubr.bf16.gmra.mxu0 %v2041
      %v2130 = vpop.f32.mrf.mxu0
      %v2131 = vadd.f32 %v2046, %v2130
      %v2132 = vpop.f32.mrf.mxu0
      %v2133 = vpop.f32.mrf.mxu0
      %v2134 = vpop.f32.mrf.mxu0
      %2135 = vdwg.mxu0
      %v2136 = vmax.f32 %v2131, 0.0
      %v2137 = vpack.c.bf16 %v2136, %v2136
      %v2139 = vlaneseq
      %v2140 = vshrl.u32 %v2139, 7
      %v2141 = vsub.s32 0, %v2140
      %v2142 = vrot.slane %v2040, %v2141
      %v2160 = vunpack.c.l.b16 %v2023
      %v2161 = vunpack.c.l.b16 %v2024
      %v2162 = vunpack.c.l.b16 %v2025
      %v2163 = vunpack.c.l.b16 %v2026
      %v2164 = vunpack.c.l.b16 %v2027
      %v2165 = vunpack.c.l.b16 %v2028
      %v2166 = vunpack.c.l.b16 %v2029
      %v2167 = vunpack.c.l.b16 %v2030
      %v2168 = vunpack.c.l.b16 %v2031
      %v2169 = vunpack.c.l.b16 %v2032
      %v2170 = vunpack.c.l.b16 %v2033
      %v2171 = vunpack.c.l.b16 %v2034
      %v2172 = vunpack.c.l.b16 %v2035
      %v2173 = vunpack.c.l.b16 %v2036
      %v2174 = vunpack.c.l.b16 %v2037
      %v2175 = vunpack.c.l.b16 %v2038
      %v2176 = vpack.c.b16 %v2161, %v2160
      %v2177 = vpack.c.b16 %v2163, %v2162
      %v2178 = vpack.c.b16 %v2165, %v2164
      %v2179 = vpack.c.b16 %v2167, %v2166
      %v2180 = vpack.c.b16 %v2169, %v2168
      %v2181 = vpack.c.b16 %v2171, %v2170
      %v2182 = vpack.c.b16 %v2173, %v2172
      %v2183 = vpack.c.b16 %v2175, %v2174
      %2192 = vmatprep.subr.bf16.mxu0 0
      %2193 = vmatpush1.bf16.msra.mxu0 %v2183
      %2194 = vmatprep.subr.bf16.mxu0 0
      %2195 = vmatpush1.bf16.msra.mxu0 %v2182
      %2196 = vmatprep.subr.bf16.mxu0 0
      %2197 = vmatpush1.bf16.msra.mxu0 %v2181
      %2198 = vmatprep.subr.bf16.mxu0 0
      %2199 = vmatpush1.bf16.msra.mxu0 %v2180
      %2200 = vmatprep.subr.bf16.mxu0 0
      %2201 = vmatpush1.bf16.msra.mxu0 %v2179
      %2202 = vmatprep.subr.bf16.mxu0 0
      %2203 = vmatpush1.bf16.msra.mxu0 %v2178
      %2204 = vmatprep.subr.bf16.mxu0 0
      %2205 = vmatpush1.bf16.msra.mxu0 %v2177
      %2206 = vmatprep.subr.bf16.mxu0 0
      %2207 = vmatpush1.bf16.msra.mxu0 %v2176
      %2208 = vmatprep.subr.bf16.mxu0 0
      %2209 = vmatpush2.bf16.msra.mxu0 0
      %2210 = vmatprep.subr.bf16.mxu0 0
      %2211 = vmatpush2.bf16.msra.mxu0 0
      %2212 = vmatprep.subr.bf16.mxu0 0
      %2213 = vmatpush2.bf16.msra.mxu0 0
      %2214 = vmatprep.subr.bf16.mxu0 0
      %2215 = vmatpush2.bf16.msra.mxu0 0
      %2216 = vmatprep.subr.bf16.mxu0 0
      %2217 = vmatpush2.bf16.msra.mxu0 0
      %2218 = vmatprep.subr.bf16.mxu0 0
      %2219 = vmatpush2.bf16.msra.mxu0 0
      %2220 = vmatprep.subr.bf16.mxu0 0
      %2221 = vmatpush2.bf16.msra.mxu0 0
      %2222 = vmatprep.subr.bf16.mxu0 0
      %2223 = vmatpush2.bf16.msra.mxu0 0
      %2224 = vmatprep.mubr.bf16.mxu0 0
      %2225 = vmatmul.mubr.bf16.gmra.mxu0 %v2137
      %v2226 = vpop.f32.mrf.mxu0
      %v2227 = vadd.f32 %v2142, %v2226
      %v2228 = vpop.f32.mrf.mxu0
      %v2229 = vpop.f32.mrf.mxu0
      %v2230 = vpop.f32.mrf.mxu0
      %2231 = vdwg.mxu0
      %2232 = vst [vmem:[#allocation10] sm:$0xff] %v2227
    $region33: #{tpu_custom_call.1} parent=1 // pred_fallthru
      _
    // Predicated region
    $region34: #{tpu_custom_call.1} parent=1 // pred_check
      _
    $region35: #{tpu_custom_call.1} parent=1 // pred_check_branch
      %2234 = sbr.rel (0) target = $region37
    $region36: #{tpu_custom_call.1} parent=1 // pred_region
      %s2236 = ssub.s32 128, 128
      %2237 = vsyncadd [#allocation7], %s2236
      %s2239 = sshll.u32 [#allocation10], 4
      %s2240 = int_to_ptr.vmem [resolvable:$true] %s2239
      %2242 = dma.vmem_to_hbm [thread:$0]  %s2240, 128, %s4, [#allocation7]
    $region37: #{tpu_custom_call.1} parent=1 // pred_fallthru
      _
    // Predicated region
    $region38: #{tpu_custom_call.1} parent=1 // pred_check
      _
    $region39: #{tpu_custom_call.1} parent=1 // pred_check_branch
      %2244 = sbr.rel (0) target = $region41
    $region40: #{tpu_custom_call.1} parent=1 // pred_region
      %2245 = dma.done [#allocation7], 128
    $region41: #{tpu_custom_call.1} parent=1 // pred_fallthru
      _
    %2246 = vsyncpa [#allocation6], 1
    %2247 = vsyncpa [#allocation9], 1
    %2248 = vsyncpa [#allocation7], 1

</llo_original>
